<compile_context>
chip_gen: v7x
topology: tpu7x:2x2x1
jax: 0.10.0
libtpu: 0.0.40
codegen_flags: <defaults>
</compile_context>

<pallas_src>
import jax
import jax.numpy as jnp
from jax.experimental import pallas as pl
from jax.experimental.pallas import tpu as pltpu
import numpy as np


def _round_up(x, m):
    return ((x + m - 1) // m) * m


def generator_kernel(xe_ref, noise_ref, wihe_ref, wihl_ref, whh_ref, b_ref,
                     wfc_ref, bfc_ref, out_ref, gx_ref, hseq_ref):
    """Whole-sequence LSTM + output projection in a single invocation.

    xe_ref   : (T*Bp, E)     bf16 time-major flattened char embeddings
    noise_ref: (Bp, L)       bf16 per-sample latent noise (time invariant)
    wihe_ref : (E, 4Hp)      bf16 input->gates weights, embedding part
    wihl_ref : (L, 4Hp)      bf16 input->gates weights, noise part
    whh_ref  : (Hp, 4Hp)     bf16 hidden->gates weights (gate order i, f, g, o)
    b_ref    : (1, 4Hp)      f32  combined bias (b_ih + b_hh), per-gate padded
    wfc_ref  : (Hp, Vp)      bf16 output projection weights, lane padded
    bfc_ref  : (1, Vp)       f32  output projection bias, lane padded
    out_ref  : (T*Bp, Vp)    f32  logits, time-major, lane padded
    gx_ref   : (T, Bp, 4Hp)  f32  VMEM scratch: staged input projections
    hseq_ref : (T, Bp, Hp)   f32  VMEM scratch: every hidden state
    """
    T, Bp, G4 = gx_ref.shape
    Hp = G4 // 4

    # ---- Phase 1 (batched, off the serial path): input projections on the
    # MXU with bf16 inputs / f32 accumulation.  Staged into VMEM scratch so
    # the recurrence only does free leading-axis ref reads.
    gx = jnp.dot(xe_ref[...], wihe_ref[...],
                 preferred_element_type=jnp.float32)                # (T*Bp,4Hp)
    gx_ref[...] = gx.reshape(T, Bp, G4)
    ng = (jnp.dot(noise_ref[...], wihl_ref[...],
                  preferred_element_type=jnp.float32)
          + b_ref[...])                                             # (Bp, 4Hp)
    whh = whh_ref[...]                                              # (Hp, 4Hp)

    # ---- Phase 2: serial recurrence.  Per step: one tiny (Bp,Hp)@(Hp,4Hp)
    # matmul + elementwise LSTM math.  Gate slices are lane-aligned (each gate
    # owns a Hp=128k block); activations applied AFTER slicing.
    def step(t, carry):
        h, c = carry
        gates = (gx_ref[t] + ng
                 + jnp.dot(h.astype(whh.dtype), whh,
                           preferred_element_type=jnp.float32))     # (Bp, 4Hp)
        if_g = jax.nn.sigmoid(gates[:, 0:2 * Hp])                   # i, f
        g_g = jnp.tanh(gates[:, 2 * Hp:3 * Hp])                     # g
        o_g = jax.nn.sigmoid(gates[:, 3 * Hp:4 * Hp])               # o
        i_g = if_g[:, 0:Hp]
        f_g = if_g[:, Hp:2 * Hp]
        c_new = f_g * c + i_g * g_g
        h_new = o_g * jnp.tanh(c_new)
        hseq_ref[t] = h_new
        return h_new, c_new

    h0 = jnp.zeros((Bp, Hp), jnp.float32)
    c0 = jnp.zeros((Bp, Hp), jnp.float32)
    jax.lax.fori_loop(0, T, step, (h0, c0), unroll=(T <= 16))

    # ---- Phase 3 (batched epilogue): one (T*Bp, Hp) @ (Hp, Vp) matmul and
    # one lane-dense store.
    hs = hseq_ref[...].reshape(T * Bp, Hp).astype(wfc_ref.dtype)
    out_ref[...] = (jnp.dot(hs, wfc_ref[...],
                            preferred_element_type=jnp.float32)
                    + bfc_ref[...]).astype(out_ref.dtype)


def generator_forward(params, noise, prev_chars):
    """Equivalent of Generator.forward(noise, prev_chars).

    noise      : (B, latent_dim)  float32
    prev_chars : (B, T)           int32
    returns    : (B, T, vocab_size) float32
    """
    emb = params["embedding"]       # (V, E)
    w_ih = params["w_ih"]           # (D, 4H)  with D = E + L
    w_hh = params["w_hh"]           # (H, 4H)
    b = params["b"]                 # (1, 4H)
    w_fc = params["w_fc"]           # (H, V)
    b_fc = params["b_fc"]           # (1, V)

    B, T = prev_chars.shape
    V, E = emb.shape
    L = noise.shape[1]
    H = w_hh.shape[0]

    Bp = _round_up(B, 8)            # full-sublane batch
    Hp = _round_up(H, 128)          # per-gate lane block
    Vp = _round_up(V, 128)          # lane-dense output width

    def pad_gate_cols(w):
        """(..., 4H) -> (..., 4Hp): pad each gate's columns to Hp lanes."""
        lead = w.shape[:-1]
        w4 = w.reshape(lead + (4, H))
        w4 = jnp.pad(w4, [(0, 0)] * len(lead) + [(0, 0), (0, Hp - H)])
        return w4.reshape(lead + (4 * Hp,))

    # Split input->gate weights into embedding / noise halves (no concatenated
    # LSTM input is ever materialized), pad per gate, cast MXU inputs to bf16.
    w_ih_e = pad_gate_cols(w_ih[:E, :]).astype(jnp.bfloat16)         # (E, 4Hp)
    w_ih_l = pad_gate_cols(w_ih[E:, :]).astype(jnp.bfloat16)         # (L, 4Hp)
    w_hh_p = jnp.pad(pad_gate_cols(w_hh),
                     ((0, Hp - H), (0, 0))).astype(jnp.bfloat16)     # (Hp, 4Hp)
    b_p = pad_gate_cols(b)                                           # (1, 4Hp)
    w_fc_p = jnp.pad(w_fc, ((0, Hp - H), (0, Vp - V))).astype(jnp.bfloat16)
    b_fc_p = jnp.pad(b_fc, ((0, 0), (0, Vp - V)))                    # (1, Vp)

    # Batch padding (padded rows compute garbage that is sliced off).
    noise_p = jnp.pad(noise, ((0, Bp - B), (0, 0))).astype(jnp.bfloat16)
    ids_p = jnp.pad(prev_chars, ((0, Bp - B), (0, 0)))               # (Bp, T)

    # Glue (data-dependent gather stays in JAX): time-major flattened
    # embedding lookup, row index = t*Bp + b.
    ids_tb = jnp.transpose(ids_p, (1, 0)).reshape(-1)                # (T*Bp,)
    x_emb = jnp.take(emb, ids_tb, axis=0).astype(jnp.bfloat16)       # (T*Bp, E)

    try:
        vmem_cap = pltpu.get_tpu_info().vmem_capacity_bytes
    except Exception:
        vmem_cap = 64 * 1024 * 1024
    cparams = pltpu.CompilerParams(vmem_limit_bytes=int(vmem_cap * 3 // 4))

    vmem = pl.BlockSpec(memory_space=pltpu.MemorySpace.VMEM)
    out_flat = pl.pallas_call(
        generator_kernel,
        out_shape=jax.ShapeDtypeStruct((T * Bp, Vp), jnp.float32),
        in_specs=[vmem] * 8,
        out_specs=vmem,
        scratch_shapes=[pltpu.VMEM((T, Bp, 4 * Hp), jnp.float32),    # gx
                        pltpu.VMEM((T, Bp, Hp), jnp.float32)],       # h history
        compiler_params=cparams,
    )(x_emb, noise_p, w_ih_e, w_ih_l, w_hh_p, b_p, w_fc_p, b_fc_p)

    logits_tbv = out_flat.reshape(T, Bp, Vp)[:, :B, :V]              # (T, B, V)
    return jnp.transpose(logits_tbv, (1, 0, 2))                      # (B, T, V)


def generator_forward_ref(params, noise, prev_chars):
    """Pure-JAX f32 reference (mirrors the PyTorch semantics) for validation."""
    emb = params["embedding"]
    w_ih, w_hh, b = params["w_ih"], params["w_hh"], params["b"]
    w_fc, b_fc = params["w_fc"], params["b_fc"]
    H = w_hh.shape[0]

    B, T = prev_chars.shape
    char_embeds = jnp.take(emb, prev_chars, axis=0)
    noise_exp = jnp.broadcast_to(noise[:, None, :], (B, T, noise.shape[1]))
    x = jnp.concatenate([char_embeds, noise_exp], axis=2)            # (B, T, D)

    def step(carry, x_t):
        h, c = carry
        gates = x_t @ w_ih + h @ w_hh + b[0]
        i_g = jax.nn.sigmoid(gates[:, 0 * H:1 * H])
        f_g = jax.nn.sigmoid(gates[:, 1 * H:2 * H])
        g_g = jnp.tanh(gates[:, 2 * H:3 * H])
        o_g = jax.nn.sigmoid(gates[:, 3 * H:4 * H])
        c_new = f_g * c + i_g * g_g
        h_new = o_g * jnp.tanh(c_new)
        return (h_new, c_new), h_new

    h0 = jnp.zeros((B, H), jnp.float32)
    c0 = jnp.zeros((B, H), jnp.float32)
    _, hs = jax.lax.scan(step, (h0, c0), jnp.transpose(x, (1, 0, 2)))
    lstm_out = jnp.transpose(hs, (1, 0, 2))                          # (B, T, H)
    return lstm_out @ w_fc + b_fc[0]


def init_params(key, vocab_size, embedding_dim, hidden_dim, latent_dim):
    D = embedding_dim + latent_dim
    H = hidden_dim
    k_emb, k_ih, k_hh, k_bih, k_bhh, k_fw, k_fb = jax.random.split(key, 7)
    s = 1.0 / np.sqrt(H)
    b_ih = jax.random.uniform(k_bih, (4 * H,), jnp.float32, -s, s)
    b_hh = jax.random.uniform(k_bhh, (4 * H,), jnp.float32, -s, s)
    return {
        "embedding": jax.random.normal(k_emb, (vocab_size, embedding_dim),
                                       jnp.float32),
        "w_ih": jax.random.uniform(k_ih, (D, 4 * H), jnp.float32, -s, s),
        "w_hh": jax.random.uniform(k_hh, (H, 4 * H), jnp.float32, -s, s),
        "b": (b_ih + b_hh)[None, :],                                  # (1, 4H)
        "w_fc": jax.random.uniform(k_fw, (H, vocab_size), jnp.float32, -s, s),
        "b_fc": jax.random.uniform(k_fb, (1, vocab_size), jnp.float32, -s, s),
    }


if __name__ == "__main__":
    vocab_size, embedding_dim, hidden_dim, latent_dim = 32, 16, 32, 8
    B, T = 2, 8

    key = jax.random.PRNGKey(0)
    k_params, k_noise, k_chars = jax.random.split(key, 3)

    params = init_params(k_params, vocab_size, embedding_dim, hidden_dim,
                         latent_dim)
    noise = jax.random.normal(k_noise, (B, latent_dim), jnp.float32)
    prev_chars = jax.random.randint(k_chars, (B, T), 0, vocab_size,
                                    dtype=jnp.int32)

    logits = jax.block_until_ready(generator_forward(params, noise,
                                                     prev_chars))
    ref = jax.block_until_ready(generator_forward_ref(params, noise,
                                                      prev_chars))
    assert logits.shape == (B, T, vocab_size)
    # bf16 MXU inputs (f32 accumulation / f32 state): relaxed tolerance vs
    # the pure-f32 reference, per the perf review's correctness note.
    np.testing.assert_allclose(np.asarray(logits), np.asarray(ref),
                               atol=5e-2, rtol=5e-2)
    print("KERNEL_OK")
</pallas_src>

<mosaic_0001>
module attributes {stable_mosaic.version = 11 : i64} {
  func.func @generator_kernel(%arg0: memref<64x16xbf16, #tpu.memory_space<vmem>>, %arg1: memref<8x8xbf16, #tpu.memory_space<vmem>>, %arg2: memref<16x512xbf16, #tpu.memory_space<vmem>>, %arg3: memref<8x512xbf16, #tpu.memory_space<vmem>>, %arg4: memref<128x512xbf16, #tpu.memory_space<vmem>>, %arg5: memref<1x512xf32, #tpu.memory_space<vmem>>, %arg6: memref<128x128xbf16, #tpu.memory_space<vmem>>, %arg7: memref<1x128xf32, #tpu.memory_space<vmem>>, %arg8: memref<64x128xf32, #tpu.memory_space<vmem>>, %arg9: memref<8x8x512xf32, #tpu.memory_space<vmem>>, %arg10: memref<8x8x128xf32, #tpu.memory_space<vmem>>) attributes {dimension_semantics = [], scalar_prefetch = 0 : i64, scratch_operands = 2 : i64, tpu.core_type = #tpu.core_type<tc>} {
    %c0 = arith.constant 0 : index
    %c0_0 = arith.constant 0 : index
    %0 = vector.load %arg0[%c0, %c0_0] : memref<64x16xbf16, #tpu.memory_space<vmem>>, vector<64x16xbf16>
    %c0_1 = arith.constant 0 : index
    %c0_2 = arith.constant 0 : index
    %1 = vector.load %arg2[%c0_1, %c0_2] : memref<16x512xbf16, #tpu.memory_space<vmem>>, vector<16x512xbf16>
    %cst = arith.constant dense<0.000000e+00> : vector<64x512xf32>
    %2 = tpu.matmul %0, %1, %cst {dimension_numbers = #tpu.dot_dimension_numbers<[1], [0], [0], [1], [0, 0, 1, 1], [], []>} : vector<64x16xbf16>, vector<16x512xbf16>, vector<64x512xf32> -> vector<64x512xf32>
    %3 = vector.shape_cast %2 : vector<64x512xf32> to vector<8x8x512xf32>
    %c0_3 = arith.constant 0 : index
    %c0_4 = arith.constant 0 : index
    %c0_5 = arith.constant 0 : index
    %4 = vector.load %arg9[%c0_3, %c0_4, %c0_5] : memref<8x8x512xf32, #tpu.memory_space<vmem>>, vector<8x8x512xf32>
    tpu.vector_store %arg9[%c0_3, %c0_4, %c0_5], %3 {strides = array<i32>} : memref<8x8x512xf32, #tpu.memory_space<vmem>>, vector<8x8x512xf32>,
    %c0_6 = arith.constant 0 : index
    %c0_7 = arith.constant 0 : index
    %5 = vector.load %arg1[%c0_6, %c0_7] : memref<8x8xbf16, #tpu.memory_space<vmem>>, vector<8x8xbf16>
    %c0_8 = arith.constant 0 : index
    %c0_9 = arith.constant 0 : index
    %6 = vector.load %arg3[%c0_8, %c0_9] : memref<8x512xbf16, #tpu.memory_space<vmem>>, vector<8x512xbf16>
    %cst_10 = arith.constant dense<0.000000e+00> : vector<8x512xf32>
    %7 = tpu.matmul %5, %6, %cst_10 {dimension_numbers = #tpu.dot_dimension_numbers<[1], [0], [0], [1], [0, 0, 1, 1], [], []>} : vector<8x8xbf16>, vector<8x512xbf16>, vector<8x512xf32> -> vector<8x512xf32>
    %c0_11 = arith.constant 0 : index
    %c0_12 = arith.constant 0 : index
    %8 = vector.load %arg5[%c0_11, %c0_12] : memref<1x512xf32, #tpu.memory_space<vmem>>, vector<1x512xf32>
    %9 = vector.broadcast %8 : vector<1x512xf32> to vector<8x512xf32>
    %10 = arith.addf %7, %9 : vector<8x512xf32>
    %c0_13 = arith.constant 0 : index
    %c0_14 = arith.constant 0 : index
    %11 = vector.load %arg4[%c0_13, %c0_14] : memref<128x512xbf16, #tpu.memory_space<vmem>>, vector<128x512xbf16>
    %cst_15 = arith.constant 0.000000e+00 : f32
    %12 = vector.broadcast %cst_15 : f32 to vector<8x128xf32>
    %cst_16 = arith.constant 0.000000e+00 : f32
    %13 = vector.broadcast %cst_16 : f32 to vector<8x128xf32>
    %c0_i32 = arith.constant 0 : i32
    %14 = arith.index_cast %c0_i32 : i32 to index
    %c0_17 = arith.constant 0 : index
    %c0_18 = arith.constant 0 : index
    %15 = vector.load %arg9[%14, %c0_17, %c0_18] : memref<8x8x512xf32, #tpu.memory_space<vmem>>, vector<1x8x512xf32>
    %16 = vector.shape_cast %15 : vector<1x8x512xf32> to vector<8x512xf32>
    %17 = arith.addf %16, %10 : vector<8x512xf32>
    %18 = arith.truncf %12 : vector<8x128xf32> to vector<8x128xbf16>
    %cst_19 = arith.constant dense<0.000000e+00> : vector<8x512xf32>
    %19 = tpu.matmul %18, %11, %cst_19 {dimension_numbers = #tpu.dot_dimension_numbers<[1], [0], [0], [1], [0, 0, 1, 1], [], []>} : vector<8x128xbf16>, vector<128x512xbf16>, vector<8x512xf32> -> vector<8x512xf32>
    %20 = arith.addf %17, %19 : vector<8x512xf32>
    %21 = vector.extract_strided_slice %20 {offsets = [0, 0], sizes = [8, 256], strides = [1, 1]} : vector<8x512xf32> to vector<8x256xf32>
    %22 = arith.negf %21 : vector<8x256xf32>
    %23 = math.exp %22 : vector<8x256xf32>
    %cst_20 = arith.constant 1.000000e+00 : f32
    %24 = vector.broadcast %cst_20 : f32 to vector<8x256xf32>
    %25 = arith.addf %24, %23 : vector<8x256xf32>
    %26 = arith.divf %24, %25 : vector<8x256xf32>
    %27 = vector.extract_strided_slice %20 {offsets = [0, 256], sizes = [8, 128], strides = [1, 1]} : vector<8x512xf32> to vector<8x128xf32>
    %28 = math.tanh %27 : vector<8x128xf32>
    %29 = vector.extract_strided_slice %20 {offsets = [0, 384], sizes = [8, 128], strides = [1, 1]} : vector<8x512xf32> to vector<8x128xf32>
    %30 = arith.negf %29 : vector<8x128xf32>
    %31 = math.exp %30 : vector<8x128xf32>
    %cst_21 = arith.constant 1.000000e+00 : f32
    %32 = vector.broadcast %cst_21 : f32 to vector<8x128xf32>
    %33 = arith.addf %32, %31 : vector<8x128xf32>
    %34 = arith.divf %32, %33 : vector<8x128xf32>
    %35 = vector.extract_strided_slice %26 {offsets = [0, 0], sizes = [8, 128], strides = [1, 1]} : vector<8x256xf32> to vector<8x128xf32>
    %36 = vector.extract_strided_slice %26 {offsets = [0, 128], sizes = [8, 128], strides = [1, 1]} : vector<8x256xf32> to vector<8x128xf32>
    %37 = arith.mulf %36, %13 : vector<8x128xf32>
    %38 = arith.mulf %35, %28 : vector<8x128xf32>
    %39 = arith.addf %37, %38 : vector<8x128xf32>
    %40 = math.tanh %39 : vector<8x128xf32>
    %41 = arith.mulf %34, %40 : vector<8x128xf32>
    %42 = arith.index_cast %c0_i32 : i32 to index
    %c0_22 = arith.constant 0 : index
    %c0_23 = arith.constant 0 : index
    %43 = vector.load %arg10[%42, %c0_22, %c0_23] : memref<8x8x128xf32, #tpu.memory_space<vmem>>, vector<1x8x128xf32>
    %44 = vector.shape_cast %43 : vector<1x8x128xf32> to vector<8x128xf32>
    %45 = vector.shape_cast %41 : vector<8x128xf32> to vector<1x8x128xf32>
    tpu.vector_store %arg10[%42, %c0_22, %c0_23], %45 {strides = array<i32>} : memref<8x8x128xf32, #tpu.memory_space<vmem>>, vector<1x8x128xf32>,
    %c1_i32 = arith.constant 1 : i32
    %46 = arith.index_cast %c1_i32 : i32 to index
    %c0_24 = arith.constant 0 : index
    %c0_25 = arith.constant 0 : index
    %47 = vector.load %arg9[%46, %c0_24, %c0_25] : memref<8x8x512xf32, #tpu.memory_space<vmem>>, vector<1x8x512xf32>
    %48 = vector.shape_cast %47 : vector<1x8x512xf32> to vector<8x512xf32>
    %49 = arith.addf %48, %10 : vector<8x512xf32>
    %50 = arith.truncf %41 : vector<8x128xf32> to vector<8x128xbf16>
    %cst_26 = arith.constant dense<0.000000e+00> : vector<8x512xf32>
    %51 = tpu.matmul %50, %11, %cst_26 {dimension_numbers = #tpu.dot_dimension_numbers<[1], [0], [0], [1], [0, 0, 1, 1], [], []>} : vector<8x128xbf16>, vector<128x512xbf16>, vector<8x512xf32> -> vector<8x512xf32>
    %52 = arith.addf %49, %51 : vector<8x512xf32>
    %53 = vector.extract_strided_slice %52 {offsets = [0, 0], sizes = [8, 256], strides = [1, 1]} : vector<8x512xf32> to vector<8x256xf32>
    %54 = arith.negf %53 : vector<8x256xf32>
    %55 = math.exp %54 : vector<8x256xf32>
    %cst_27 = arith.constant 1.000000e+00 : f32
    %56 = vector.broadcast %cst_27 : f32 to vector<8x256xf32>
    %57 = arith.addf %56, %55 : vector<8x256xf32>
    %58 = arith.divf %56, %57 : vector<8x256xf32>
    %59 = vector.extract_strided_slice %52 {offsets = [0, 256], sizes = [8, 128], strides = [1, 1]} : vector<8x512xf32> to vector<8x128xf32>
    %60 = math.tanh %59 : vector<8x128xf32>
    %61 = vector.extract_strided_slice %52 {offsets = [0, 384], sizes = [8, 128], strides = [1, 1]} : vector<8x512xf32> to vector<8x128xf32>
    %62 = arith.negf %61 : vector<8x128xf32>
    %63 = math.exp %62 : vector<8x128xf32>
    %cst_28 = arith.constant 1.000000e+00 : f32
    %64 = vector.broadcast %cst_28 : f32 to vector<8x128xf32>
    %65 = arith.addf %64, %63 : vector<8x128xf32>
    %66 = arith.divf %64, %65 : vector<8x128xf32>
    %67 = vector.extract_strided_slice %58 {offsets = [0, 0], sizes = [8, 128], strides = [1, 1]} : vector<8x256xf32> to vector<8x128xf32>
    %68 = vector.extract_strided_slice %58 {offsets = [0, 128], sizes = [8, 128], strides = [1, 1]} : vector<8x256xf32> to vector<8x128xf32>
    %69 = arith.mulf %68, %39 : vector<8x128xf32>
    %70 = arith.mulf %67, %60 : vector<8x128xf32>
    %71 = arith.addf %69, %70 : vector<8x128xf32>
    %72 = math.tanh %71 : vector<8x128xf32>
    %73 = arith.mulf %66, %72 : vector<8x128xf32>
    %74 = arith.index_cast %c1_i32 : i32 to index
    %c0_29 = arith.constant 0 : index
    %c0_30 = arith.constant 0 : index
    %75 = vector.load %arg10[%74, %c0_29, %c0_30] : memref<8x8x128xf32, #tpu.memory_space<vmem>>, vector<1x8x128xf32>
    %76 = vector.shape_cast %75 : vector<1x8x128xf32> to vector<8x128xf32>
    %77 = vector.shape_cast %73 : vector<8x128xf32> to vector<1x8x128xf32>
    tpu.vector_store %arg10[%74, %c0_29, %c0_30], %77 {strides = array<i32>} : memref<8x8x128xf32, #tpu.memory_space<vmem>>, vector<1x8x128xf32>,
    %c2_i32 = arith.constant 2 : i32
    %78 = arith.index_cast %c2_i32 : i32 to index
    %c0_31 = arith.constant 0 : index
    %c0_32 = arith.constant 0 : index
    %79 = vector.load %arg9[%78, %c0_31, %c0_32] : memref<8x8x512xf32, #tpu.memory_space<vmem>>, vector<1x8x512xf32>
    %80 = vector.shape_cast %79 : vector<1x8x512xf32> to vector<8x512xf32>
    %81 = arith.addf %80, %10 : vector<8x512xf32>
    %82 = arith.truncf %73 : vector<8x128xf32> to vector<8x128xbf16>
    %cst_33 = arith.constant dense<0.000000e+00> : vector<8x512xf32>
    %83 = tpu.matmul %82, %11, %cst_33 {dimension_numbers = #tpu.dot_dimension_numbers<[1], [0], [0], [1], [0, 0, 1, 1], [], []>} : vector<8x128xbf16>, vector<128x512xbf16>, vector<8x512xf32> -> vector<8x512xf32>
    %84 = arith.addf %81, %83 : vector<8x512xf32>
    %85 = vector.extract_strided_slice %84 {offsets = [0, 0], sizes = [8, 256], strides = [1, 1]} : vector<8x512xf32> to vector<8x256xf32>
    %86 = arith.negf %85 : vector<8x256xf32>
    %87 = math.exp %86 : vector<8x256xf32>
    %cst_34 = arith.constant 1.000000e+00 : f32
    %88 = vector.broadcast %cst_34 : f32 to vector<8x256xf32>
    %89 = arith.addf %88, %87 : vector<8x256xf32>
    %90 = arith.divf %88, %89 : vector<8x256xf32>
    %91 = vector.extract_strided_slice %84 {offsets = [0, 256], sizes = [8, 128], strides = [1, 1]} : vector<8x512xf32> to vector<8x128xf32>
    %92 = math.tanh %91 : vector<8x128xf32>
    %93 = vector.extract_strided_slice %84 {offsets = [0, 384], sizes = [8, 128], strides = [1, 1]} : vector<8x512xf32> to vector<8x128xf32>
    %94 = arith.negf %93 : vector<8x128xf32>
    %95 = math.exp %94 : vector<8x128xf32>
    %cst_35 = arith.constant 1.000000e+00 : f32
    %96 = vector.broadcast %cst_35 : f32 to vector<8x128xf32>
    %97 = arith.addf %96, %95 : vector<8x128xf32>
    %98 = arith.divf %96, %97 : vector<8x128xf32>
    %99 = vector.extract_strided_slice %90 {offsets = [0, 0], sizes = [8, 128], strides = [1, 1]} : vector<8x256xf32> to vector<8x128xf32>
    %100 = vector.extract_strided_slice %90 {offsets = [0, 128], sizes = [8, 128], strides = [1, 1]} : vector<8x256xf32> to vector<8x128xf32>
    %101 = arith.mulf %100, %71 : vector<8x128xf32>
    %102 = arith.mulf %99, %92 : vector<8x128xf32>
    %103 = arith.addf %101, %102 : vector<8x128xf32>
    %104 = math.tanh %103 : vector<8x128xf32>
    %105 = arith.mulf %98, %104 : vector<8x128xf32>
    %106 = arith.index_cast %c2_i32 : i32 to index
    %c0_36 = arith.constant 0 : index
    %c0_37 = arith.constant 0 : index
    %107 = vector.load %arg10[%106, %c0_36, %c0_37] : memref<8x8x128xf32, #tpu.memory_space<vmem>>, vector<1x8x128xf32>
    %108 = vector.shape_cast %107 : vector<1x8x128xf32> to vector<8x128xf32>
    %109 = vector.shape_cast %105 : vector<8x128xf32> to vector<1x8x128xf32>
    tpu.vector_store %arg10[%106, %c0_36, %c0_37], %109 {strides = array<i32>} : memref<8x8x128xf32, #tpu.memory_space<vmem>>, vector<1x8x128xf32>,
    %c3_i32 = arith.constant 3 : i32
    %110 = arith.index_cast %c3_i32 : i32 to index
    %c0_38 = arith.constant 0 : index
    %c0_39 = arith.constant 0 : index
    %111 = vector.load %arg9[%110, %c0_38, %c0_39] : memref<8x8x512xf32, #tpu.memory_space<vmem>>, vector<1x8x512xf32>
    %112 = vector.shape_cast %111 : vector<1x8x512xf32> to vector<8x512xf32>
    %113 = arith.addf %112, %10 : vector<8x512xf32>
    %114 = arith.truncf %105 : vector<8x128xf32> to vector<8x128xbf16>
    %cst_40 = arith.constant dense<0.000000e+00> : vector<8x512xf32>
    %115 = tpu.matmul %114, %11, %cst_40 {dimension_numbers = #tpu.dot_dimension_numbers<[1], [0], [0], [1], [0, 0, 1, 1], [], []>} : vector<8x128xbf16>, vector<128x512xbf16>, vector<8x512xf32> -> vector<8x512xf32>
    %116 = arith.addf %113, %115 : vector<8x512xf32>
    %117 = vector.extract_strided_slice %116 {offsets = [0, 0], sizes = [8, 256], strides = [1, 1]} : vector<8x512xf32> to vector<8x256xf32>
    %118 = arith.negf %117 : vector<8x256xf32>
    %119 = math.exp %118 : vector<8x256xf32>
    %cst_41 = arith.constant 1.000000e+00 : f32
    %120 = vector.broadcast %cst_41 : f32 to vector<8x256xf32>
    %121 = arith.addf %120, %119 : vector<8x256xf32>
    %122 = arith.divf %120, %121 : vector<8x256xf32>
    %123 = vector.extract_strided_slice %116 {offsets = [0, 256], sizes = [8, 128], strides = [1, 1]} : vector<8x512xf32> to vector<8x128xf32>
    %124 = math.tanh %123 : vector<8x128xf32>
    %125 = vector.extract_strided_slice %116 {offsets = [0, 384], sizes = [8, 128], strides = [1, 1]} : vector<8x512xf32> to vector<8x128xf32>
    %126 = arith.negf %125 : vector<8x128xf32>
    %127 = math.exp %126 : vector<8x128xf32>
    %cst_42 = arith.constant 1.000000e+00 : f32
    %128 = vector.broadcast %cst_42 : f32 to vector<8x128xf32>
    %129 = arith.addf %128, %127 : vector<8x128xf32>
    %130 = arith.divf %128, %129 : vector<8x128xf32>
    %131 = vector.extract_strided_slice %122 {offsets = [0, 0], sizes = [8, 128], strides = [1, 1]} : vector<8x256xf32> to vector<8x128xf32>
    %132 = vector.extract_strided_slice %122 {offsets = [0, 128], sizes = [8, 128], strides = [1, 1]} : vector<8x256xf32> to vector<8x128xf32>
    %133 = arith.mulf %132, %103 : vector<8x128xf32>
    %134 = arith.mulf %131, %124 : vector<8x128xf32>
    %135 = arith.addf %133, %134 : vector<8x128xf32>
    %136 = math.tanh %135 : vector<8x128xf32>
    %137 = arith.mulf %130, %136 : vector<8x128xf32>
    %138 = arith.index_cast %c3_i32 : i32 to index
    %c0_43 = arith.constant 0 : index
    %c0_44 = arith.constant 0 : index
    %139 = vector.load %arg10[%138, %c0_43, %c0_44] : memref<8x8x128xf32, #tpu.memory_space<vmem>>, vector<1x8x128xf32>
    %140 = vector.shape_cast %139 : vector<1x8x128xf32> to vector<8x128xf32>
    %141 = vector.shape_cast %137 : vector<8x128xf32> to vector<1x8x128xf32>
    tpu.vector_store %arg10[%138, %c0_43, %c0_44], %141 {strides = array<i32>} : memref<8x8x128xf32, #tpu.memory_space<vmem>>, vector<1x8x128xf32>,
    %c4_i32 = arith.constant 4 : i32
    %142 = arith.index_cast %c4_i32 : i32 to index
    %c0_45 = arith.constant 0 : index
    %c0_46 = arith.constant 0 : index
    %143 = vector.load %arg9[%142, %c0_45, %c0_46] : memref<8x8x512xf32, #tpu.memory_space<vmem>>, vector<1x8x512xf32>
    %144 = vector.shape_cast %143 : vector<1x8x512xf32> to vector<8x512xf32>
    %145 = arith.addf %144, %10 : vector<8x512xf32>
    %146 = arith.truncf %137 : vector<8x128xf32> to vector<8x128xbf16>
    %cst_47 = arith.constant dense<0.000000e+00> : vector<8x512xf32>
    %147 = tpu.matmul %146, %11, %cst_47 {dimension_numbers = #tpu.dot_dimension_numbers<[1], [0], [0], [1], [0, 0, 1, 1], [], []>} : vector<8x128xbf16>, vector<128x512xbf16>, vector<8x512xf32> -> vector<8x512xf32>
    %148 = arith.addf %145, %147 : vector<8x512xf32>
    %149 = vector.extract_strided_slice %148 {offsets = [0, 0], sizes = [8, 256], strides = [1, 1]} : vector<8x512xf32> to vector<8x256xf32>
    %150 = arith.negf %149 : vector<8x256xf32>
    %151 = math.exp %150 : vector<8x256xf32>
    %cst_48 = arith.constant 1.000000e+00 : f32
    %152 = vector.broadcast %cst_48 : f32 to vector<8x256xf32>
    %153 = arith.addf %152, %151 : vector<8x256xf32>
    %154 = arith.divf %152, %153 : vector<8x256xf32>
    %155 = vector.extract_strided_slice %148 {offsets = [0, 256], sizes = [8, 128], strides = [1, 1]} : vector<8x512xf32> to vector<8x128xf32>
    %156 = math.tanh %155 : vector<8x128xf32>
    %157 = vector.extract_strided_slice %148 {offsets = [0, 384], sizes = [8, 128], strides = [1, 1]} : vector<8x512xf32> to vector<8x128xf32>
    %158 = arith.negf %157 : vector<8x128xf32>
    %159 = math.exp %158 : vector<8x128xf32>
    %cst_49 = arith.constant 1.000000e+00 : f32
    %160 = vector.broadcast %cst_49 : f32 to vector<8x128xf32>
    %161 = arith.addf %160, %159 : vector<8x128xf32>
    %162 = arith.divf %160, %161 : vector<8x128xf32>
    %163 = vector.extract_strided_slice %154 {offsets = [0, 0], sizes = [8, 128], strides = [1, 1]} : vector<8x256xf32> to vector<8x128xf32>
    %164 = vector.extract_strided_slice %154 {offsets = [0, 128], sizes = [8, 128], strides = [1, 1]} : vector<8x256xf32> to vector<8x128xf32>
    %165 = arith.mulf %164, %135 : vector<8x128xf32>
    %166 = arith.mulf %163, %156 : vector<8x128xf32>
    %167 = arith.addf %165, %166 : vector<8x128xf32>
    %168 = math.tanh %167 : vector<8x128xf32>
    %169 = arith.mulf %162, %168 : vector<8x128xf32>
    %170 = arith.index_cast %c4_i32 : i32 to index
    %c0_50 = arith.constant 0 : index
    %c0_51 = arith.constant 0 : index
    %171 = vector.load %arg10[%170, %c0_50, %c0_51] : memref<8x8x128xf32, #tpu.memory_space<vmem>>, vector<1x8x128xf32>
    %172 = vector.shape_cast %171 : vector<1x8x128xf32> to vector<8x128xf32>
    %173 = vector.shape_cast %169 : vector<8x128xf32> to vector<1x8x128xf32>
    tpu.vector_store %arg10[%170, %c0_50, %c0_51], %173 {strides = array<i32>} : memref<8x8x128xf32, #tpu.memory_space<vmem>>, vector<1x8x128xf32>,
    %c5_i32 = arith.constant 5 : i32
    %174 = arith.index_cast %c5_i32 : i32 to index
    %c0_52 = arith.constant 0 : index
    %c0_53 = arith.constant 0 : index
    %175 = vector.load %arg9[%174, %c0_52, %c0_53] : memref<8x8x512xf32, #tpu.memory_space<vmem>>, vector<1x8x512xf32>
    %176 = vector.shape_cast %175 : vector<1x8x512xf32> to vector<8x512xf32>
    %177 = arith.addf %176, %10 : vector<8x512xf32>
    %178 = arith.truncf %169 : vector<8x128xf32> to vector<8x128xbf16>
    %cst_54 = arith.constant dense<0.000000e+00> : vector<8x512xf32>
    %179 = tpu.matmul %178, %11, %cst_54 {dimension_numbers = #tpu.dot_dimension_numbers<[1], [0], [0], [1], [0, 0, 1, 1], [], []>} : vector<8x128xbf16>, vector<128x512xbf16>, vector<8x512xf32> -> vector<8x512xf32>
    %180 = arith.addf %177, %179 : vector<8x512xf32>
    %181 = vector.extract_strided_slice %180 {offsets = [0, 0], sizes = [8, 256], strides = [1, 1]} : vector<8x512xf32> to vector<8x256xf32>
    %182 = arith.negf %181 : vector<8x256xf32>
    %183 = math.exp %182 : vector<8x256xf32>
    %cst_55 = arith.constant 1.000000e+00 : f32
    %184 = vector.broadcast %cst_55 : f32 to vector<8x256xf32>
    %185 = arith.addf %184, %183 : vector<8x256xf32>
    %186 = arith.divf %184, %185 : vector<8x256xf32>
    %187 = vector.extract_strided_slice %180 {offsets = [0, 256], sizes = [8, 128], strides = [1, 1]} : vector<8x512xf32> to vector<8x128xf32>
    %188 = math.tanh %187 : vector<8x128xf32>
    %189 = vector.extract_strided_slice %180 {offsets = [0, 384], sizes = [8, 128], strides = [1, 1]} : vector<8x512xf32> to vector<8x128xf32>
    %190 = arith.negf %189 : vector<8x128xf32>
    %191 = math.exp %190 : vector<8x128xf32>
    %cst_56 = arith.constant 1.000000e+00 : f32
    %192 = vector.broadcast %cst_56 : f32 to vector<8x128xf32>
    %193 = arith.addf %192, %191 : vector<8x128xf32>
    %194 = arith.divf %192, %193 : vector<8x128xf32>
    %195 = vector.extract_strided_slice %186 {offsets = [0, 0], sizes = [8, 128], strides = [1, 1]} : vector<8x256xf32> to vector<8x128xf32>
    %196 = vector.extract_strided_slice %186 {offsets = [0, 128], sizes = [8, 128], strides = [1, 1]} : vector<8x256xf32> to vector<8x128xf32>
    %197 = arith.mulf %196, %167 : vector<8x128xf32>
    %198 = arith.mulf %195, %188 : vector<8x128xf32>
    %199 = arith.addf %197, %198 : vector<8x128xf32>
    %200 = math.tanh %199 : vector<8x128xf32>
    %201 = arith.mulf %194, %200 : vector<8x128xf32>
    %202 = arith.index_cast %c5_i32 : i32 to index
    %c0_57 = arith.constant 0 : index
    %c0_58 = arith.constant 0 : index
    %203 = vector.load %arg10[%202, %c0_57, %c0_58] : memref<8x8x128xf32, #tpu.memory_space<vmem>>, vector<1x8x128xf32>
    %204 = vector.shape_cast %203 : vector<1x8x128xf32> to vector<8x128xf32>
    %205 = vector.shape_cast %201 : vector<8x128xf32> to vector<1x8x128xf32>
    tpu.vector_store %arg10[%202, %c0_57, %c0_58], %205 {strides = array<i32>} : memref<8x8x128xf32, #tpu.memory_space<vmem>>, vector<1x8x128xf32>,
    %c6_i32 = arith.constant 6 : i32
    %206 = arith.index_cast %c6_i32 : i32 to index
    %c0_59 = arith.constant 0 : index
    %c0_60 = arith.constant 0 : index
    %207 = vector.load %arg9[%206, %c0_59, %c0_60] : memref<8x8x512xf32, #tpu.memory_space<vmem>>, vector<1x8x512xf32>
    %208 = vector.shape_cast %207 : vector<1x8x512xf32> to vector<8x512xf32>
    %209 = arith.addf %208, %10 : vector<8x512xf32>
    %210 = arith.truncf %201 : vector<8x128xf32> to vector<8x128xbf16>
    %cst_61 = arith.constant dense<0.000000e+00> : vector<8x512xf32>
    %211 = tpu.matmul %210, %11, %cst_61 {dimension_numbers = #tpu.dot_dimension_numbers<[1], [0], [0], [1], [0, 0, 1, 1], [], []>} : vector<8x128xbf16>, vector<128x512xbf16>, vector<8x512xf32> -> vector<8x512xf32>
    %212 = arith.addf %209, %211 : vector<8x512xf32>
    %213 = vector.extract_strided_slice %212 {offsets = [0, 0], sizes = [8, 256], strides = [1, 1]} : vector<8x512xf32> to vector<8x256xf32>
    %214 = arith.negf %213 : vector<8x256xf32>
    %215 = math.exp %214 : vector<8x256xf32>
    %cst_62 = arith.constant 1.000000e+00 : f32
    %216 = vector.broadcast %cst_62 : f32 to vector<8x256xf32>
    %217 = arith.addf %216, %215 : vector<8x256xf32>
    %218 = arith.divf %216, %217 : vector<8x256xf32>
    %219 = vector.extract_strided_slice %212 {offsets = [0, 256], sizes = [8, 128], strides = [1, 1]} : vector<8x512xf32> to vector<8x128xf32>
    %220 = math.tanh %219 : vector<8x128xf32>
    %221 = vector.extract_strided_slice %212 {offsets = [0, 384], sizes = [8, 128], strides = [1, 1]} : vector<8x512xf32> to vector<8x128xf32>
    %222 = arith.negf %221 : vector<8x128xf32>
    %223 = math.exp %222 : vector<8x128xf32>
    %cst_63 = arith.constant 1.000000e+00 : f32
    %224 = vector.broadcast %cst_63 : f32 to vector<8x128xf32>
    %225 = arith.addf %224, %223 : vector<8x128xf32>
    %226 = arith.divf %224, %225 : vector<8x128xf32>
    %227 = vector.extract_strided_slice %218 {offsets = [0, 0], sizes = [8, 128], strides = [1, 1]} : vector<8x256xf32> to vector<8x128xf32>
    %228 = vector.extract_strided_slice %218 {offsets = [0, 128], sizes = [8, 128], strides = [1, 1]} : vector<8x256xf32> to vector<8x128xf32>
    %229 = arith.mulf %228, %199 : vector<8x128xf32>
    %230 = arith.mulf %227, %220 : vector<8x128xf32>
    %231 = arith.addf %229, %230 : vector<8x128xf32>
    %232 = math.tanh %231 : vector<8x128xf32>
    %233 = arith.mulf %226, %232 : vector<8x128xf32>
    %234 = arith.index_cast %c6_i32 : i32 to index
    %c0_64 = arith.constant 0 : index
    %c0_65 = arith.constant 0 : index
    %235 = vector.load %arg10[%234, %c0_64, %c0_65] : memref<8x8x128xf32, #tpu.memory_space<vmem>>, vector<1x8x128xf32>
    %236 = vector.shape_cast %235 : vector<1x8x128xf32> to vector<8x128xf32>
    %237 = vector.shape_cast %233 : vector<8x128xf32> to vector<1x8x128xf32>
    tpu.vector_store %arg10[%234, %c0_64, %c0_65], %237 {strides = array<i32>} : memref<8x8x128xf32, #tpu.memory_space<vmem>>, vector<1x8x128xf32>,
    %c7_i32 = arith.constant 7 : i32
    %238 = arith.index_cast %c7_i32 : i32 to index
    %c0_66 = arith.constant 0 : index
    %c0_67 = arith.constant 0 : index
    %239 = vector.load %arg9[%238, %c0_66, %c0_67] : memref<8x8x512xf32, #tpu.memory_space<vmem>>, vector<1x8x512xf32>
    %240 = vector.shape_cast %239 : vector<1x8x512xf32> to vector<8x512xf32>
    %241 = arith.addf %240, %10 : vector<8x512xf32>
    %242 = arith.truncf %233 : vector<8x128xf32> to vector<8x128xbf16>
    %cst_68 = arith.constant dense<0.000000e+00> : vector<8x512xf32>
    %243 = tpu.matmul %242, %11, %cst_68 {dimension_numbers = #tpu.dot_dimension_numbers<[1], [0], [0], [1], [0, 0, 1, 1], [], []>} : vector<8x128xbf16>, vector<128x512xbf16>, vector<8x512xf32> -> vector<8x512xf32>
    %244 = arith.addf %241, %243 : vector<8x512xf32>
    %245 = vector.extract_strided_slice %244 {offsets = [0, 0], sizes = [8, 256], strides = [1, 1]} : vector<8x512xf32> to vector<8x256xf32>
    %246 = arith.negf %245 : vector<8x256xf32>
    %247 = math.exp %246 : vector<8x256xf32>
    %cst_69 = arith.constant 1.000000e+00 : f32
    %248 = vector.broadcast %cst_69 : f32 to vector<8x256xf32>
    %249 = arith.addf %248, %247 : vector<8x256xf32>
    %250 = arith.divf %248, %249 : vector<8x256xf32>
    %251 = vector.extract_strided_slice %244 {offsets = [0, 256], sizes = [8, 128], strides = [1, 1]} : vector<8x512xf32> to vector<8x128xf32>
    %252 = math.tanh %251 : vector<8x128xf32>
    %253 = vector.extract_strided_slice %244 {offsets = [0, 384], sizes = [8, 128], strides = [1, 1]} : vector<8x512xf32> to vector<8x128xf32>
    %254 = arith.negf %253 : vector<8x128xf32>
    %255 = math.exp %254 : vector<8x128xf32>
    %cst_70 = arith.constant 1.000000e+00 : f32
    %256 = vector.broadcast %cst_70 : f32 to vector<8x128xf32>
    %257 = arith.addf %256, %255 : vector<8x128xf32>
    %258 = arith.divf %256, %257 : vector<8x128xf32>
    %259 = vector.extract_strided_slice %250 {offsets = [0, 0], sizes = [8, 128], strides = [1, 1]} : vector<8x256xf32> to vector<8x128xf32>
    %260 = vector.extract_strided_slice %250 {offsets = [0, 128], sizes = [8, 128], strides = [1, 1]} : vector<8x256xf32> to vector<8x128xf32>
    %261 = arith.mulf %260, %231 : vector<8x128xf32>
    %262 = arith.mulf %259, %252 : vector<8x128xf32>
    %263 = arith.addf %261, %262 : vector<8x128xf32>
    %264 = math.tanh %263 : vector<8x128xf32>
    %265 = arith.mulf %258, %264 : vector<8x128xf32>
    %266 = arith.index_cast %c7_i32 : i32 to index
    %c0_71 = arith.constant 0 : index
    %c0_72 = arith.constant 0 : index
    %267 = vector.load %arg10[%266, %c0_71, %c0_72] : memref<8x8x128xf32, #tpu.memory_space<vmem>>, vector<1x8x128xf32>
    %268 = vector.shape_cast %267 : vector<1x8x128xf32> to vector<8x128xf32>
    %269 = vector.shape_cast %265 : vector<8x128xf32> to vector<1x8x128xf32>
    tpu.vector_store %arg10[%266, %c0_71, %c0_72], %269 {strides = array<i32>} : memref<8x8x128xf32, #tpu.memory_space<vmem>>, vector<1x8x128xf32>,
    %c8_i32 = arith.constant 8 : i32
    %c0_73 = arith.constant 0 : index
    %c0_74 = arith.constant 0 : index
    %c0_75 = arith.constant 0 : index
    %270 = vector.load %arg10[%c0_73, %c0_74, %c0_75] : memref<8x8x128xf32, #tpu.memory_space<vmem>>, vector<8x8x128xf32>
    %271 = vector.shape_cast %270 : vector<8x8x128xf32> to vector<64x128xf32>
    %272 = arith.truncf %271 : vector<64x128xf32> to vector<64x128xbf16>
    %c0_76 = arith.constant 0 : index
    %c0_77 = arith.constant 0 : index
    %273 = vector.load %arg6[%c0_76, %c0_77] : memref<128x128xbf16, #tpu.memory_space<vmem>>, vector<128x128xbf16>
    %cst_78 = arith.constant dense<0.000000e+00> : vector<64x128xf32>
    %274 = tpu.matmul %272, %273, %cst_78 {dimension_numbers = #tpu.dot_dimension_numbers<[1], [0], [0], [1], [0, 0, 1, 1], [], []>} : vector<64x128xbf16>, vector<128x128xbf16>, vector<64x128xf32> -> vector<64x128xf32>
    %c0_79 = arith.constant 0 : index
    %c0_80 = arith.constant 0 : index
    %275 = vector.load %arg7[%c0_79, %c0_80] : memref<1x128xf32, #tpu.memory_space<vmem>>, vector<1x128xf32>
    %276 = vector.broadcast %275 : vector<1x128xf32> to vector<64x128xf32>
    %277 = arith.addf %274, %276 : vector<64x128xf32>
    %c0_81 = arith.constant 0 : index
    %c0_82 = arith.constant 0 : index
    %278 = vector.load %arg8[%c0_81, %c0_82] : memref<64x128xf32, #tpu.memory_space<vmem>>, vector<64x128xf32>
    tpu.vector_store %arg8[%c0_81, %c0_82], %277 {strides = array<i32>} : memref<64x128xf32, #tpu.memory_space<vmem>>, vector<64x128xf32>,
    return
  }
}

</mosaic_0001>

<llo_original>
// kernel: tpu_custom_call.1
$region0: #{tpu_custom_call.1}
  #allocation0 [shape = 'u32[]', space=smem, size = 0x4, offset = 0x4, fixed_abs, tag = 'smem constant byte address 0x4 - core index']
  #allocation1 [shape = 'u32[144,128]{1,0:T(1,128)}', space=vmem, size = 0x12000, scoped, tag = 'internal scratch']
  #allocation2 [shape = 'f32[8,8,512]{2,1,0:T(8,128)}', space=vmem, size = 0x20000, scoped, tag = 'scratch operand']
  #allocation3 [shape = 'f32[8,8,128]{2,1,0:T(8,128)}', space=vmem, size = 0x8000, scoped, tag = 'scratch operand']
  %s0 = inlined_call_operand.vmem [shape: bf16[64,16], index: 0, kind: input, shape index: {}]
  %s1 = inlined_call_operand.hbm [shape: bf16[8,8], index: 1, kind: input, shape index: {}]
  %s2 = inlined_call_operand.vmem [shape: bf16[16,512], index: 2, kind: input, shape index: {}]
  %s3 = inlined_call_operand.vmem [shape: bf16[8,512], index: 3, kind: input, shape index: {}]
  %s4 = inlined_call_operand.hbm [shape: bf16[128,512], index: 4, kind: input, shape index: {}]
  %s5 = inlined_call_operand.vmem [shape: f32[1,512], index: 5, kind: input, shape index: {}]
  %s6 = inlined_call_operand.hbm [shape: bf16[128,128], index: 6, kind: input, shape index: {}]
  %s7 = inlined_call_operand.vmem [shape: f32[1,128], index: 7, kind: input, shape index: {}]
  %s8 = inlined_call_operand.hbm [shape: f32[64,128], index: 8, kind: output, shape index: {}]
  %s9 = sld [smem:[#allocation0]]
  $region54: #{tpu_custom_call.1} parent=0
    _
  %s11 = ssub.s32 1, %s9
  %s12 = scalar_select 0, %s11, %s9
  $region1: #{tpu_custom_call.1} parent=0
    #allocation4 [shape = 'u8[2048]{0}', space=vmem, size = 0x800, scoped, tag = 'input window, operand 1, single buffered']
    #allocation5 [shape = 's32[1]{0}', space=sflag, size = 0x4, scoped, tag = 'scoped memory for tpu_custom_call.1']
    #allocation6 [shape = 's32[1]{0}', space=sflag, size = 0x4, scoped, tag = 'scoped memory for tpu_custom_call.1']
    #allocation7 [shape = 'u8[131072]{0}', space=vmem, size = 0x20000, scoped, tag = 'input window, operand 4, single buffered']
    #allocation8 [shape = 's32[1]{0}', space=sflag, size = 0x4, scoped, tag = 'scoped memory for tpu_custom_call.1']
    #allocation9 [shape = 'u8[32768]{0}', space=vmem, size = 0x8000, scoped, tag = 'input window, operand 6, single buffered']
    #allocation10 [shape = 'u8[32768]{0}', space=vmem, size = 0x8000, scoped, tag = 'output window, operand 0, single buffered']
    %13 = vsyncpa [#allocation5], 0
    %14 = vsyncpa [#allocation8], 0
    %15 = vsyncpa [#allocation6], 0
    // Predicated region
    $region2: #{tpu_custom_call.1} parent=1 // pred_check
      _
    $region3: #{tpu_custom_call.1} parent=1 // pred_check_branch
      %17 = sbr.rel (0) target = $region5
    $region4: #{tpu_custom_call.1} parent=1 // pred_region
      _
    $region5: #{tpu_custom_call.1} parent=1 // pred_fallthru
      _
    // Predicated region
    $region6: #{tpu_custom_call.1} parent=1 // pred_check
      _
    $region7: #{tpu_custom_call.1} parent=1 // pred_check_branch
      %19 = sbr.rel (0) target = $region9
    $region8: #{tpu_custom_call.1} parent=1 // pred_region
      %s21 = ssub.s32 64, 64
      %22 = vsyncadd [#allocation5], %s21
      %s24 = sshll.u32 [#allocation4], 4
      %s25 = int_to_ptr.vmem [resolvable:$true] %s24
      %27 = dma.hbm_to_vmem [thread:$0]  %s1, 64, %s25, [#allocation5]
    $region9: #{tpu_custom_call.1} parent=1 // pred_fallthru
      _
    // Predicated region
    $region10: #{tpu_custom_call.1} parent=1 // pred_check
      _
    $region11: #{tpu_custom_call.1} parent=1 // pred_check_branch
      %29 = sbr.rel (0) target = $region13
    $region12: #{tpu_custom_call.1} parent=1 // pred_region
      _
    $region13: #{tpu_custom_call.1} parent=1 // pred_fallthru
      _
    // Predicated region
    $region14: #{tpu_custom_call.1} parent=1 // pred_check
      _
    $region15: #{tpu_custom_call.1} parent=1 // pred_check_branch
      %31 = sbr.rel (0) target = $region17
    $region16: #{tpu_custom_call.1} parent=1 // pred_region
      _
    $region17: #{tpu_custom_call.1} parent=1 // pred_fallthru
      _
    // Predicated region
    $region18: #{tpu_custom_call.1} parent=1 // pred_check
      _
    $region19: #{tpu_custom_call.1} parent=1 // pred_check_branch
      %33 = sbr.rel (0) target = $region21
    $region20: #{tpu_custom_call.1} parent=1 // pred_region
      %s35 = ssub.s32 4096, 4096
      %36 = vsyncadd [#allocation8], %s35
      %s37 = sshll.u32 [#allocation7], 4
      %s38 = int_to_ptr.vmem [resolvable:$true] %s37
      %43 = dma.hbm_to_vmem [thread:$0]  %s4, 4096, %s38, [#allocation8], 256, 256, 16
    $region21: #{tpu_custom_call.1} parent=1 // pred_fallthru
      _
    // Predicated region
    $region22: #{tpu_custom_call.1} parent=1 // pred_check
      _
    $region23: #{tpu_custom_call.1} parent=1 // pred_check_branch
      %45 = sbr.rel (0) target = $region25
    $region24: #{tpu_custom_call.1} parent=1 // pred_region
      _
    $region25: #{tpu_custom_call.1} parent=1 // pred_fallthru
      _
    // Predicated region
    $region26: #{tpu_custom_call.1} parent=1 // pred_check
      _
    $region27: #{tpu_custom_call.1} parent=1 // pred_check_branch
      %47 = sbr.rel (0) target = $region29
    $region28: #{tpu_custom_call.1} parent=1 // pred_region
      %s49 = ssub.s32 1024, 1024
      %50 = vsyncadd [#allocation8], %s49
      %s51 = sshll.u32 [#allocation9], 4
      %s52 = int_to_ptr.vmem [resolvable:$true] %s51
      %57 = dma.hbm_to_vmem [thread:$0]  %s6, 1024, %s52, [#allocation8], 64, 64, 4
    $region29: #{tpu_custom_call.1} parent=1 // pred_fallthru
      _
    // Predicated region
    $region30: #{tpu_custom_call.1} parent=1 // pred_check
      _
    $region31: #{tpu_custom_call.1} parent=1 // pred_check_branch
      %59 = sbr.rel (0) target = $region33
    $region32: #{tpu_custom_call.1} parent=1 // pred_region
      _
    $region33: #{tpu_custom_call.1} parent=1 // pred_fallthru
      _
    // Predicated region
    $region34: #{tpu_custom_call.1} parent=1 // pred_check
      _
    $region35: #{tpu_custom_call.1} parent=1 // pred_check_branch
      %61 = sbr.rel (0) target = $region37
    $region36: #{tpu_custom_call.1} parent=1 // pred_region
      %62 = dma.done [#allocation5], 64
    $region37: #{tpu_custom_call.1} parent=1 // pred_fallthru
      _
    // Predicated region
    $region38: #{tpu_custom_call.1} parent=1 // pred_check
      _
    $region39: #{tpu_custom_call.1} parent=1 // pred_check_branch
      %64 = sbr.rel (0) target = $region41
    $region40: #{tpu_custom_call.1} parent=1 // pred_region
      %65 = dma.done [#allocation8], 4096
    $region41: #{tpu_custom_call.1} parent=1 // pred_fallthru
      _
    // Predicated region
    $region42: #{tpu_custom_call.1} parent=1 // pred_check
      _
    $region43: #{tpu_custom_call.1} parent=1 // pred_check_branch
      %67 = sbr.rel (0) target = $region45
    $region44: #{tpu_custom_call.1} parent=1 // pred_region
      %68 = dma.done [#allocation8], 1024
    $region45: #{tpu_custom_call.1} parent=1 // pred_fallthru
      _
    %v70 = vld [vmem:[%s0] sm:$0xf]
    %v71 = vld [vmem:[%s0 + $0x4] sm:$0xf]
    %v72 = vld [vmem:[%s0 + $0x8] sm:$0xf]
    %v73 = vld [vmem:[%s0 + $0xc] sm:$0xf]
    %v74 = vld [vmem:[%s0 + $0x10] sm:$0xf]
    %v75 = vld [vmem:[%s0 + $0x14] sm:$0xf]
    %v76 = vld [vmem:[%s0 + $0x18] sm:$0xf]
    %v77 = vld [vmem:[%s0 + $0x1c] sm:$0xf]
    %v78 = vld [vmem:[%s2] sm:$0xff]
    %v79 = vld [vmem:[%s2 + $0x8] sm:$0xff]
    %v80 = vld [vmem:[%s2 + $0x10] sm:$0xff]
    %v81 = vld [vmem:[%s2 + $0x18] sm:$0xff]
    %v90 = vunpack.c.l.b16 %v70
    %v91 = vunpack.c.l.b16 %v71
    %v92 = vunpack.c.l.b16 %v72
    %v93 = vunpack.c.l.b16 %v73
    %v94 = vunpack.c.l.b16 %v74
    %v95 = vunpack.c.l.b16 %v75
    %v96 = vunpack.c.l.b16 %v76
    %v97 = vunpack.c.l.b16 %v77
    %v98 = vpack.c.b16 %v91, %v90
    %v99 = vpack.c.b16 %v93, %v92
    %v100 = vpack.c.b16 %v95, %v94
    %v101 = vpack.c.b16 %v97, %v96
    %v106 = vunpack.c.l.b16 %v78
    %v107 = vunpack.c.h.b16 %v78
    %v108 = vunpack.c.l.b16 %v79
    %v109 = vunpack.c.h.b16 %v79
    %v110 = vunpack.c.l.b16 %v80
    %v111 = vunpack.c.h.b16 %v80
    %v112 = vunpack.c.l.b16 %v81
    %v113 = vunpack.c.h.b16 %v81
    %v114 = vpack.c.b16 %v110, %v106
    %v115 = vpack.c.b16 %v111, %v107
    %v116 = vpack.c.b16 %v112, %v108
    %v117 = vpack.c.b16 %v113, %v109
    %vm122 = vcmask 130048
    %v124 = vsel %vm122, %v98, 0
    %v127 = vsel %vm122, %v99, 0
    %v130 = vsel %vm122, %v100, 0
    %v133 = vsel %vm122, %v101, 0
    %135 = vmatprep.subr.bf16.mxu0 %v115
    %136 = vmatpush1.bf16.msra.mxu0 %v114
    %137 = vmatprep.subr.bf16.mxu0 0
    %138 = vmatpush1.bf16.msra.mxu0 0
    %139 = vmatprep.subr.bf16.mxu0 0
    %140 = vmatpush1.bf16.msra.mxu0 0
    %141 = vmatprep.subr.bf16.mxu0 0
    %142 = vmatpush1.bf16.msra.mxu0 0
    %143 = vmatprep.subr.bf16.mxu0 0
    %144 = vmatpush1.bf16.msra.mxu0 0
    %145 = vmatprep.subr.bf16.mxu0 0
    %146 = vmatpush1.bf16.msra.mxu0 0
    %147 = vmatprep.subr.bf16.mxu0 0
    %148 = vmatpush1.bf16.msra.mxu0 0
    %149 = vmatprep.subr.bf16.mxu0 0
    %150 = vmatpush1.bf16.msra.mxu0 0
    %151 = vmatprep.subr.bf16.mxu0 0
    %152 = vmatpush1.bf16.msra.mxu0 0
    %153 = vmatprep.subr.bf16.mxu0 0
    %154 = vmatpush1.bf16.msra.mxu0 0
    %155 = vmatprep.subr.bf16.mxu0 0
    %156 = vmatpush1.bf16.msra.mxu0 0
    %157 = vmatprep.subr.bf16.mxu0 0
    %158 = vmatpush1.bf16.msra.mxu0 0
    %159 = vmatprep.subr.bf16.mxu0 0
    %160 = vmatpush1.bf16.msra.mxu0 0
    %161 = vmatprep.subr.bf16.mxu0 0
    %162 = vmatpush1.bf16.msra.mxu0 0
    %163 = vmatprep.subr.bf16.mxu0 0
    %164 = vmatpush1.bf16.msra.mxu0 0
    %165 = vmatprep.subr.bf16.mxu0 0
    %166 = vmatpush1.bf16.msra.mxu0 0
    %167 = vmatprep.mubr.bf16.mxu0 0
    %168 = vmatmul.mubr.bf16.gmra.mrb[0].mxu0 %v124
    %v169 = vpop.f32.mrb[0].mxu0
    %v170 = vadd.f32 0.0, %v169
    %v171 = vpop.f32.mrb[0].mxu0
    %v172 = vadd.f32 0.0, %v171
    %v173 = vpop.f32.mrb[0].mxu0
    %v174 = vadd.f32 0.0, %v173
    %v175 = vpop.f32.mrb[0].mxu0
    %v176 = vadd.f32 0.0, %v175
    %177 = vmatprep.mubr.bf16.mxu0 0
    %178 = vmatmul.mubr.bf16.gmra.mrb[0].mxu0 %v127
    %v179 = vpop.f32.mrb[0].mxu0
    %v180 = vadd.f32 0.0, %v179
    %v181 = vpop.f32.mrb[0].mxu0
    %v182 = vadd.f32 0.0, %v181
    %v183 = vpop.f32.mrb[0].mxu0
    %v184 = vadd.f32 0.0, %v183
    %v185 = vpop.f32.mrb[0].mxu0
    %v186 = vadd.f32 0.0, %v185
    %187 = vmatprep.mubr.bf16.mxu0 0
    %188 = vmatmul.mubr.bf16.gmra.mrb[0].mxu0 %v130
    %v189 = vpop.f32.mrb[0].mxu0
    %v190 = vadd.f32 0.0, %v189
    %v191 = vpop.f32.mrb[0].mxu0
    %v192 = vadd.f32 0.0, %v191
    %v193 = vpop.f32.mrb[0].mxu0
    %v194 = vadd.f32 0.0, %v193
    %v195 = vpop.f32.mrb[0].mxu0
    %v196 = vadd.f32 0.0, %v195
    %197 = vmatprep.mubr.bf16.mxu0 0
    %198 = vmatmul.mubr.bf16.gmra.mrb[0].mxu0 %v133
    %v199 = vpop.f32.mrb[0].mxu0
    %v200 = vadd.f32 0.0, %v199
    %v201 = vpop.f32.mrb[0].mxu0
    %v202 = vadd.f32 0.0, %v201
    %v203 = vpop.f32.mrb[0].mxu0
    %v204 = vadd.f32 0.0, %v203
    %v205 = vpop.f32.mrb[0].mxu0
    %v206 = vadd.f32 0.0, %v205
    %207 = vdwg.mxu0
    %208 = vmatprep.subr.bf16.mxu0 %v117
    %209 = vmatpush1.bf16.msra.mxu0 %v116
    %210 = vmatprep.subr.bf16.mxu0 0
    %211 = vmatpush1.bf16.msra.mxu0 0
    %212 = vmatprep.subr.bf16.mxu0 0
    %213 = vmatpush1.bf16.msra.mxu0 0
    %214 = vmatprep.subr.bf16.mxu0 0
    %215 = vmatpush1.bf16.msra.mxu0 0
    %216 = vmatprep.subr.bf16.mxu0 0
    %217 = vmatpush1.bf16.msra.mxu0 0
    %218 = vmatprep.subr.bf16.mxu0 0
    %219 = vmatpush1.bf16.msra.mxu0 0
    %220 = vmatprep.subr.bf16.mxu0 0
    %221 = vmatpush1.bf16.msra.mxu0 0
    %222 = vmatprep.subr.bf16.mxu0 0
    %223 = vmatpush1.bf16.msra.mxu0 0
    %224 = vmatprep.subr.bf16.mxu0 0
    %225 = vmatpush1.bf16.msra.mxu0 0
    %226 = vmatprep.subr.bf16.mxu0 0
    %227 = vmatpush1.bf16.msra.mxu0 0
    %228 = vmatprep.subr.bf16.mxu0 0
    %229 = vmatpush1.bf16.msra.mxu0 0
    %230 = vmatprep.subr.bf16.mxu0 0
    %231 = vmatpush1.bf16.msra.mxu0 0
    %232 = vmatprep.subr.bf16.mxu0 0
    %233 = vmatpush1.bf16.msra.mxu0 0
    %234 = vmatprep.subr.bf16.mxu0 0
    %235 = vmatpush1.bf16.msra.mxu0 0
    %236 = vmatprep.subr.bf16.mxu0 0
    %237 = vmatpush1.bf16.msra.mxu0 0
    %238 = vmatprep.subr.bf16.mxu0 0
    %239 = vmatpush1.bf16.msra.mxu0 0
    %240 = vmatprep.mubr.bf16.mxu0 0
    %241 = vmatmul.mubr.bf16.gmra.mrb[0].mxu0 %v124
    %v242 = vpop.f32.mrb[0].mxu0
    %v243 = vadd.f32 0.0, %v242
    %v244 = vpop.f32.mrb[0].mxu0
    %v245 = vadd.f32 0.0, %v244
    %v246 = vpop.f32.mrb[0].mxu0
    %v247 = vadd.f32 0.0, %v246
    %v248 = vpop.f32.mrb[0].mxu0
    %v249 = vadd.f32 0.0, %v248
    %250 = vmatprep.mubr.bf16.mxu0 0
    %251 = vmatmul.mubr.bf16.gmra.mrb[0].mxu0 %v127
    %v252 = vpop.f32.mrb[0].mxu0
    %v253 = vadd.f32 0.0, %v252
    %v254 = vpop.f32.mrb[0].mxu0
    %v255 = vadd.f32 0.0, %v254
    %v256 = vpop.f32.mrb[0].mxu0
    %v257 = vadd.f32 0.0, %v256
    %v258 = vpop.f32.mrb[0].mxu0
    %v259 = vadd.f32 0.0, %v258
    %260 = vmatprep.mubr.bf16.mxu0 0
    %261 = vmatmul.mubr.bf16.gmra.mrb[0].mxu0 %v130
    %v262 = vpop.f32.mrb[0].mxu0
    %v263 = vadd.f32 0.0, %v262
    %v264 = vpop.f32.mrb[0].mxu0
    %v265 = vadd.f32 0.0, %v264
    %v266 = vpop.f32.mrb[0].mxu0
    %v267 = vadd.f32 0.0, %v266
    %v268 = vpop.f32.mrb[0].mxu0
    %v269 = vadd.f32 0.0, %v268
    %270 = vmatprep.mubr.bf16.mxu0 0
    %271 = vmatmul.mubr.bf16.gmra.mrb[0].mxu0 %v133
    %v272 = vpop.f32.mrb[0].mxu0
    %v273 = vadd.f32 0.0, %v272
    %v274 = vpop.f32.mrb[0].mxu0
    %v275 = vadd.f32 0.0, %v274
    %v276 = vpop.f32.mrb[0].mxu0
    %v277 = vadd.f32 0.0, %v276
    %v278 = vpop.f32.mrb[0].mxu0
    %v279 = vadd.f32 0.0, %v278
    %280 = vdwg.mxu0
    %281 = vst [vmem:[#allocation2] sm:$0xff] %v170
    %282 = vst [vmem:[#allocation2 + $0x8] sm:$0xff] %v172
    %283 = vst [vmem:[#allocation2 + $0x10] sm:$0xff] %v243
    %284 = vst [vmem:[#allocation2 + $0x18] sm:$0xff] %v245
    %285 = vst [vmem:[#allocation2 + $0x20] sm:$0xff] %v174
    %286 = vst [vmem:[#allocation2 + $0x28] sm:$0xff] %v176
    %287 = vst [vmem:[#allocation2 + $0x30] sm:$0xff] %v247
    %288 = vst [vmem:[#allocation2 + $0x38] sm:$0xff] %v249
    %289 = vst [vmem:[#allocation2 + $0x40] sm:$0xff] %v180
    %290 = vst [vmem:[#allocation2 + $0x48] sm:$0xff] %v182
    %291 = vst [vmem:[#allocation2 + $0x50] sm:$0xff] %v253
    %292 = vst [vmem:[#allocation2 + $0x58] sm:$0xff] %v255
    %293 = vst [vmem:[#allocation2 + $0x60] sm:$0xff] %v184
    %294 = vst [vmem:[#allocation2 + $0x68] sm:$0xff] %v186
    %295 = vst [vmem:[#allocation2 + $0x70] sm:$0xff] %v257
    %296 = vst [vmem:[#allocation2 + $0x78] sm:$0xff] %v259
    %297 = vst [vmem:[#allocation2 + $0x80] sm:$0xff] %v190
    %298 = vst [vmem:[#allocation2 + $0x88] sm:$0xff] %v192
    %299 = vst [vmem:[#allocation2 + $0x90] sm:$0xff] %v263
    %300 = vst [vmem:[#allocation2 + $0x98] sm:$0xff] %v265
    %301 = vst [vmem:[#allocation2 + $0xa0] sm:$0xff] %v194
    %302 = vst [vmem:[#allocation2 + $0xa8] sm:$0xff] %v196
    %303 = vst [vmem:[#allocation2 + $0xb0] sm:$0xff] %v267
    %304 = vst [vmem:[#allocation2 + $0xb8] sm:$0xff] %v269
    %305 = vst [vmem:[#allocation2 + $0xc0] sm:$0xff] %v200
    %306 = vst [vmem:[#allocation2 + $0xc8] sm:$0xff] %v202
    %307 = vst [vmem:[#allocation2 + $0xd0] sm:$0xff] %v273
    %308 = vst [vmem:[#allocation2 + $0xd8] sm:$0xff] %v275
    %309 = vst [vmem:[#allocation2 + $0xe0] sm:$0xff] %v204
    %310 = vst [vmem:[#allocation2 + $0xe8] sm:$0xff] %v206
    %311 = vst [vmem:[#allocation2 + $0xf0] sm:$0xff] %v277
    %312 = vst [vmem:[#allocation2 + $0xf8] sm:$0xff] %v279
    %v313 = vld [vmem:[#allocation4] sm:$0xf]
    %v314 = vld [vmem:[%s3] sm:$0xff]
    %v315 = vld [vmem:[%s3 + $0x8] sm:$0xff]
    %v316 = vld [vmem:[%s5] sm:$0xf]
    %v318 = vlaneseq
    %v319 = vshrl.u32 %v318, 7
    %v320 = vsub.s32 0, %v319
    %v321 = vrot.slane %v316, %v320
    %v322 = vlaneseq
    %v323 = vshrl.u32 %v322, 7
    %v324 = vsub.s32 1, %v323
    %v325 = vrot.slane %v316, %v324
    %v326 = vlaneseq
    %v327 = vshrl.u32 %v326, 7
    %v328 = vsub.s32 2, %v327
    %v329 = vrot.slane %v316, %v328
    %v330 = vlaneseq
    %v331 = vshrl.u32 %v330, 7
    %v332 = vsub.s32 3, %v331
    %v333 = vrot.slane %v316, %v332
    %v340 = vunpack.c.l.b16 %v314
    %v341 = vunpack.c.h.b16 %v314
    %v342 = vunpack.c.l.b16 %v315
    %v343 = vunpack.c.h.b16 %v315
    %v344 = vpack.c.b16 %v340, %v340
    %v345 = vpack.c.b16 %v341, %v341
    %v346 = vpack.c.b16 %v342, %v342
    %v347 = vpack.c.b16 %v343, %v343
    %vm348 = vcmask 64512
    %v350 = vsel %vm348, %v313, 0
    %vm352 = vcmask 1043456
    %v354 = vsel %vm352, %v344, 0
    %v357 = vsel %vm352, %v345, 0
    %v360 = vsel %vm352, %v346, 0
    %v363 = vsel %vm352, %v347, 0
    %365 = vmatprep.subr.bf16.mxu0 %v357
    %366 = vmatpush1.bf16.msra.mxu0 %v354
    %367 = vmatprep.subr.bf16.mxu0 0
    %368 = vmatpush1.bf16.msra.mxu0 0
    %369 = vmatprep.subr.bf16.mxu0 0
    %370 = vmatpush1.bf16.msra.mxu0 0
    %371 = vmatprep.subr.bf16.mxu0 0
    %372 = vmatpush1.bf16.msra.mxu0 0
    %373 = vmatprep.subr.bf16.mxu0 0
    %374 = vmatpush1.bf16.msra.mxu0 0
    %375 = vmatprep.subr.bf16.mxu0 0
    %376 = vmatpush1.bf16.msra.mxu0 0
    %377 = vmatprep.subr.bf16.mxu0 0
    %378 = vmatpush1.bf16.msra.mxu0 0
    %379 = vmatprep.subr.bf16.mxu0 0
    %380 = vmatpush1.bf16.msra.mxu0 0
    %381 = vmatprep.subr.bf16.mxu0 0
    %382 = vmatpush1.bf16.msra.mxu0 0
    %383 = vmatprep.subr.bf16.mxu0 0
    %384 = vmatpush1.bf16.msra.mxu0 0
    %385 = vmatprep.subr.bf16.mxu0 0
    %386 = vmatpush1.bf16.msra.mxu0 0
    %387 = vmatprep.subr.bf16.mxu0 0
    %388 = vmatpush1.bf16.msra.mxu0 0
    %389 = vmatprep.subr.bf16.mxu0 0
    %390 = vmatpush1.bf16.msra.mxu0 0
    %391 = vmatprep.subr.bf16.mxu0 0
    %392 = vmatpush1.bf16.msra.mxu0 0
    %393 = vmatprep.subr.bf16.mxu0 0
    %394 = vmatpush1.bf16.msra.mxu0 0
    %395 = vmatprep.subr.bf16.mxu0 0
    %396 = vmatpush1.bf16.msra.mxu0 0
    %397 = vmatprep.mubr.bf16.mxu0 0
    %398 = vmatmul.mubr.bf16.gmra.mrb[0].mxu0 %v350
    %v399 = vpop.f32.mrb[0].mxu0
    %v400 = vadd.f32 %v321, %v399
    %v401 = vpop.f32.mrb[0].mxu0
    %v402 = vadd.f32 %v325, %v401
    %v403 = vpop.f32.mrb[0].mxu0
    %v404 = vpop.f32.mrb[0].mxu0
    %405 = vdwg.mxu0
    %406 = vmatprep.subr.bf16.mxu0 %v363
    %407 = vmatpush1.bf16.msra.mxu0 %v360
    %408 = vmatprep.subr.bf16.mxu0 0
    %409 = vmatpush1.bf16.msra.mxu0 0
    %410 = vmatprep.subr.bf16.mxu0 0
    %411 = vmatpush1.bf16.msra.mxu0 0
    %412 = vmatprep.subr.bf16.mxu0 0
    %413 = vmatpush1.bf16.msra.mxu0 0
    %414 = vmatprep.subr.bf16.mxu0 0
    %415 = vmatpush1.bf16.msra.mxu0 0
    %416 = vmatprep.subr.bf16.mxu0 0
    %417 = vmatpush1.bf16.msra.mxu0 0
    %418 = vmatprep.subr.bf16.mxu0 0
    %419 = vmatpush1.bf16.msra.mxu0 0
    %420 = vmatprep.subr.bf16.mxu0 0
    %421 = vmatpush1.bf16.msra.mxu0 0
    %422 = vmatprep.subr.bf16.mxu0 0
    %423 = vmatpush1.bf16.msra.mxu0 0
    %424 = vmatprep.subr.bf16.mxu0 0
    %425 = vmatpush1.bf16.msra.mxu0 0
    %426 = vmatprep.subr.bf16.mxu0 0
    %427 = vmatpush1.bf16.msra.mxu0 0
    %428 = vmatprep.subr.bf16.mxu0 0
    %429 = vmatpush1.bf16.msra.mxu0 0
    %430 = vmatprep.subr.bf16.mxu0 0
    %431 = vmatpush1.bf16.msra.mxu0 0
    %432 = vmatprep.subr.bf16.mxu0 0
    %433 = vmatpush1.bf16.msra.mxu0 0
    %434 = vmatprep.subr.bf16.mxu0 0
    %435 = vmatpush1.bf16.msra.mxu0 0
    %436 = vmatprep.subr.bf16.mxu0 0
    %437 = vmatpush1.bf16.msra.mxu0 0
    %438 = vmatprep.mubr.bf16.mxu0 0
    %439 = vmatmul.mubr.bf16.gmra.mrb[0].mxu0 %v350
    %v440 = vpop.f32.mrb[0].mxu0
    %v441 = vadd.f32 %v329, %v440
    %v442 = vpop.f32.mrb[0].mxu0
    %v443 = vadd.f32 %v333, %v442
    %v444 = vpop.f32.mrb[0].mxu0
    %v445 = vpop.f32.mrb[0].mxu0
    %446 = vdwg.mxu0
    %v447 = vld [vmem:[#allocation7] sm:$0xff]
    %v448 = vld [vmem:[#allocation7 + $0x8] sm:$0xff]
    %v449 = vld [vmem:[#allocation7 + $0x10] sm:$0xff]
    %v450 = vld [vmem:[#allocation7 + $0x18] sm:$0xff]
    %v451 = vld [vmem:[#allocation7 + $0x20] sm:$0xff]
    %v452 = vld [vmem:[#allocation7 + $0x28] sm:$0xff]
    %v453 = vld [vmem:[#allocation7 + $0x30] sm:$0xff]
    %v454 = vld [vmem:[#allocation7 + $0x38] sm:$0xff]
    %v455 = vld [vmem:[#allocation7 + $0x40] sm:$0xff]
    %v456 = vld [vmem:[#allocation7 + $0x48] sm:$0xff]
    %v457 = vld [vmem:[#allocation7 + $0x50] sm:$0xff]
    %v458 = vld [vmem:[#allocation7 + $0x58] sm:$0xff]
    %v459 = vld [vmem:[#allocation7 + $0x60] sm:$0xff]
    %v460 = vld [vmem:[#allocation7 + $0x68] sm:$0xff]
    %v461 = vld [vmem:[#allocation7 + $0x70] sm:$0xff]
    %v462 = vld [vmem:[#allocation7 + $0x78] sm:$0xff]
    %v463 = vld [vmem:[#allocation7 + $0x80] sm:$0xff]
    %v464 = vld [vmem:[#allocation7 + $0x88] sm:$0xff]
    %v465 = vld [vmem:[#allocation7 + $0x90] sm:$0xff]
    %v466 = vld [vmem:[#allocation7 + $0x98] sm:$0xff]
    %v467 = vld [vmem:[#allocation7 + $0xa0] sm:$0xff]
    %v468 = vld [vmem:[#allocation7 + $0xa8] sm:$0xff]
    %v469 = vld [vmem:[#allocation7 + $0xb0] sm:$0xff]
    %v470 = vld [vmem:[#allocation7 + $0xb8] sm:$0xff]
    %v471 = vld [vmem:[#allocation7 + $0xc0] sm:$0xff]
    %v472 = vld [vmem:[#allocation7 + $0xc8] sm:$0xff]
    %v473 = vld [vmem:[#allocation7 + $0xd0] sm:$0xff]
    %v474 = vld [vmem:[#allocation7 + $0xd8] sm:$0xff]
    %v475 = vld [vmem:[#allocation7 + $0xe0] sm:$0xff]
    %v476 = vld [vmem:[#allocation7 + $0xe8] sm:$0xff]
    %v477 = vld [vmem:[#allocation7 + $0xf0] sm:$0xff]
    %v478 = vld [vmem:[#allocation7 + $0xf8] sm:$0xff]
    %v479 = vld [vmem:[#allocation2] sm:$0xff]
    %v480 = vld [vmem:[#allocation2 + $0x8] sm:$0xff]
    %v481 = vld [vmem:[#allocation2 + $0x10] sm:$0xff]
    %v482 = vld [vmem:[#allocation2 + $0x18] sm:$0xff]
    %v483 = vadd.f32 %v479, %v400
    %v484 = vadd.f32 %v480, %v402
    %v485 = vadd.f32 %v481, %v441
    %v486 = vadd.f32 %v482, %v443
    %v519 = vunpack.c.l.b16 %v447
    %v520 = vunpack.c.h.b16 %v447
    %v521 = vunpack.c.l.b16 %v448
    %v522 = vunpack.c.h.b16 %v448
    %v523 = vunpack.c.l.b16 %v449
    %v524 = vunpack.c.h.b16 %v449
    %v525 = vunpack.c.l.b16 %v450
    %v526 = vunpack.c.h.b16 %v450
    %v527 = vunpack.c.l.b16 %v451
    %v528 = vunpack.c.h.b16 %v451
    %v529 = vunpack.c.l.b16 %v452
    %v530 = vunpack.c.h.b16 %v452
    %v531 = vunpack.c.l.b16 %v453
    %v532 = vunpack.c.h.b16 %v453
    %v533 = vunpack.c.l.b16 %v454
    %v534 = vunpack.c.h.b16 %v454
    %v535 = vunpack.c.l.b16 %v455
    %v536 = vunpack.c.h.b16 %v455
    %v537 = vunpack.c.l.b16 %v456
    %v538 = vunpack.c.h.b16 %v456
    %v539 = vunpack.c.l.b16 %v457
    %v540 = vunpack.c.h.b16 %v457
    %v541 = vunpack.c.l.b16 %v458
    %v542 = vunpack.c.h.b16 %v458
    %v543 = vunpack.c.l.b16 %v459
    %v544 = vunpack.c.h.b16 %v459
    %v545 = vunpack.c.l.b16 %v460
    %v546 = vunpack.c.h.b16 %v460
    %v547 = vunpack.c.l.b16 %v461
    %v548 = vunpack.c.h.b16 %v461
    %v549 = vunpack.c.l.b16 %v462
    %v550 = vunpack.c.h.b16 %v462
    %v551 = vunpack.c.l.b16 %v463
    %v552 = vunpack.c.h.b16 %v463
    %v553 = vunpack.c.l.b16 %v464
    %v554 = vunpack.c.h.b16 %v464
    %v555 = vunpack.c.l.b16 %v465
    %v556 = vunpack.c.h.b16 %v465
    %v557 = vunpack.c.l.b16 %v466
    %v558 = vunpack.c.h.b16 %v466
    %v559 = vunpack.c.l.b16 %v467
    %v560 = vunpack.c.h.b16 %v467
    %v561 = vunpack.c.l.b16 %v468
    %v562 = vunpack.c.h.b16 %v468
    %v563 = vunpack.c.l.b16 %v469
    %v564 = vunpack.c.h.b16 %v469
    %v565 = vunpack.c.l.b16 %v470
    %v566 = vunpack.c.h.b16 %v470
    %v567 = vunpack.c.l.b16 %v471
    %v568 = vunpack.c.h.b16 %v471
    %v569 = vunpack.c.l.b16 %v472
    %v570 = vunpack.c.h.b16 %v472
    %v571 = vunpack.c.l.b16 %v473
    %v572 = vunpack.c.h.b16 %v473
    %v573 = vunpack.c.l.b16 %v474
    %v574 = vunpack.c.h.b16 %v474
    %v575 = vunpack.c.l.b16 %v475
    %v576 = vunpack.c.h.b16 %v475
    %v577 = vunpack.c.l.b16 %v476
    %v578 = vunpack.c.h.b16 %v476
    %v579 = vunpack.c.l.b16 %v477
    %v580 = vunpack.c.h.b16 %v477
    %v581 = vunpack.c.l.b16 %v478
    %v582 = vunpack.c.h.b16 %v478
    %v583 = vpack.c.b16 %v523, %v519
    %v584 = vpack.c.b16 %v524, %v520
    %v585 = vpack.c.b16 %v525, %v521
    %v586 = vpack.c.b16 %v526, %v522
    %v587 = vpack.c.b16 %v531, %v527
    %v588 = vpack.c.b16 %v532, %v528
    %v589 = vpack.c.b16 %v533, %v529
    %v590 = vpack.c.b16 %v534, %v530
    %v591 = vpack.c.b16 %v539, %v535
    %v592 = vpack.c.b16 %v540, %v536
    %v593 = vpack.c.b16 %v541, %v537
    %v594 = vpack.c.b16 %v542, %v538
    %v595 = vpack.c.b16 %v547, %v543
    %v596 = vpack.c.b16 %v548, %v544
    %v597 = vpack.c.b16 %v549, %v545
    %v598 = vpack.c.b16 %v550, %v546
    %v599 = vpack.c.b16 %v555, %v551
    %v600 = vpack.c.b16 %v556, %v552
    %v601 = vpack.c.b16 %v557, %v553
    %v602 = vpack.c.b16 %v558, %v554
    %v603 = vpack.c.b16 %v563, %v559
    %v604 = vpack.c.b16 %v564, %v560
    %v605 = vpack.c.b16 %v565, %v561
    %v606 = vpack.c.b16 %v566, %v562
    %v607 = vpack.c.b16 %v571, %v567
    %v608 = vpack.c.b16 %v572, %v568
    %v609 = vpack.c.b16 %v573, %v569
    %v610 = vpack.c.b16 %v574, %v570
    %v611 = vpack.c.b16 %v579, %v575
    %v612 = vpack.c.b16 %v580, %v576
    %v613 = vpack.c.b16 %v581, %v577
    %v614 = vpack.c.b16 %v582, %v578
    %647 = vmatprep.subr.bf16.mxu0 %v584
    %648 = vmatpush1.bf16.msra.mxu0 %v583
    %649 = vmatprep.subr.bf16.mxu0 %v588
    %650 = vmatpush1.bf16.msra.mxu0 %v587
    %651 = vmatprep.subr.bf16.mxu0 %v592
    %652 = vmatpush1.bf16.msra.mxu0 %v591
    %653 = vmatprep.subr.bf16.mxu0 %v596
    %654 = vmatpush1.bf16.msra.mxu0 %v595
    %655 = vmatprep.subr.bf16.mxu0 %v600
    %656 = vmatpush1.bf16.msra.mxu0 %v599
    %657 = vmatprep.subr.bf16.mxu0 %v604
    %658 = vmatpush1.bf16.msra.mxu0 %v603
    %659 = vmatprep.subr.bf16.mxu0 %v608
    %660 = vmatpush1.bf16.msra.mxu0 %v607
    %661 = vmatprep.subr.bf16.mxu0 %v612
    %662 = vmatpush1.bf16.msra.mxu0 %v611
    %663 = vmatprep.subr.bf16.mxu0 0
    %664 = vmatpush1.bf16.msra.mxu0 0
    %665 = vmatprep.subr.bf16.mxu0 0
    %666 = vmatpush1.bf16.msra.mxu0 0
    %667 = vmatprep.subr.bf16.mxu0 0
    %668 = vmatpush1.bf16.msra.mxu0 0
    %669 = vmatprep.subr.bf16.mxu0 0
    %670 = vmatpush1.bf16.msra.mxu0 0
    %671 = vmatprep.subr.bf16.mxu0 0
    %672 = vmatpush1.bf16.msra.mxu0 0
    %673 = vmatprep.subr.bf16.mxu0 0
    %674 = vmatpush1.bf16.msra.mxu0 0
    %675 = vmatprep.subr.bf16.mxu0 0
    %676 = vmatpush1.bf16.msra.mxu0 0
    %677 = vmatprep.subr.bf16.mxu0 0
    %678 = vmatpush1.bf16.msra.mxu0 0
    %679 = vmatprep.mubr.bf16.mxu0 0
    %680 = vmatmul.mubr.bf16.gmra.mrb[0].mxu0 0
    %v681 = vpop.f32.mrb[0].mxu0
    %v682 = vadd.f32 0.0, %v681
    %v683 = vpop.f32.mrb[0].mxu0
    %v684 = vadd.f32 0.0, %v683
    %v685 = vpop.f32.mrb[0].mxu0
    %v686 = vpop.f32.mrb[0].mxu0
    %687 = vdwg.mxu0
    %688 = vmatprep.subr.bf16.mxu0 %v586
    %689 = vmatpush1.bf16.msra.mxu0 %v585
    %690 = vmatprep.subr.bf16.mxu0 %v590
    %691 = vmatpush1.bf16.msra.mxu0 %v589
    %692 = vmatprep.subr.bf16.mxu0 %v594
    %693 = vmatpush1.bf16.msra.mxu0 %v593
    %694 = vmatprep.subr.bf16.mxu0 %v598
    %695 = vmatpush1.bf16.msra.mxu0 %v597
    %696 = vmatprep.subr.bf16.mxu0 %v602
    %697 = vmatpush1.bf16.msra.mxu0 %v601
    %698 = vmatprep.subr.bf16.mxu0 %v606
    %699 = vmatpush1.bf16.msra.mxu0 %v605
    %700 = vmatprep.subr.bf16.mxu0 %v610
    %701 = vmatpush1.bf16.msra.mxu0 %v609
    %702 = vmatprep.subr.bf16.mxu0 %v614
    %703 = vmatpush1.bf16.msra.mxu0 %v613
    %704 = vmatprep.subr.bf16.mxu0 0
    %705 = vmatpush1.bf16.msra.mxu0 0
    %706 = vmatprep.subr.bf16.mxu0 0
    %707 = vmatpush1.bf16.msra.mxu0 0
    %708 = vmatprep.subr.bf16.mxu0 0
    %709 = vmatpush1.bf16.msra.mxu0 0
    %710 = vmatprep.subr.bf16.mxu0 0
    %711 = vmatpush1.bf16.msra.mxu0 0
    %712 = vmatprep.subr.bf16.mxu0 0
    %713 = vmatpush1.bf16.msra.mxu0 0
    %714 = vmatprep.subr.bf16.mxu0 0
    %715 = vmatpush1.bf16.msra.mxu0 0
    %716 = vmatprep.subr.bf16.mxu0 0
    %717 = vmatpush1.bf16.msra.mxu0 0
    %718 = vmatprep.subr.bf16.mxu0 0
    %719 = vmatpush1.bf16.msra.mxu0 0
    %720 = vmatprep.mubr.bf16.mxu0 0
    %721 = vmatmul.mubr.bf16.gmra.mrb[0].mxu0 0
    %v722 = vpop.f32.mrb[0].mxu0
    %v723 = vadd.f32 0.0, %v722
    %v724 = vpop.f32.mrb[0].mxu0
    %v725 = vadd.f32 0.0, %v724
    %v726 = vpop.f32.mrb[0].mxu0
    %v727 = vpop.f32.mrb[0].mxu0
    %728 = vdwg.mxu0
    %v729 = vadd.f32 %v483, %v682
    %v730 = vadd.f32 %v484, %v684
    %v731 = vadd.f32 %v485, %v723
    %v732 = vadd.f32 %v486, %v725
    %v733 = vxor.u32 %v729, 2147483648
    %v734 = vxor.u32 %v730, 2147483648
    %v735 = vmul.f32 %v733, 1.442695
    %v736 = vpow.pop %v735
    %v737 = vmul.f32 %v734, 1.442695
    %v738 = vpow.pop %v737
    %v739 = vadd.f32 %v736, 1.0
    %v740 = vadd.f32 %v738, 1.0
    %v741 = vrcp.pop %v739
    %v742 = vmul.f32 1.0, %v741
    %v743 = vrcp.pop %v740
    %v744 = vmul.f32 1.0, %v743
    %v745 = vtanh.pop %v731
    %v746 = vxor.u32 %v732, 2147483648
    %v747 = vmul.f32 %v746, 1.442695
    %v748 = vpow.pop %v747
    %v749 = vadd.f32 %v748, 1.0
    %v750 = vrcp.pop %v749
    %v751 = vmul.f32 1.0, %v750
    %v752 = vmul.f32 %v744, 0.0
    %v753 = vmul.f32 %v742, %v745
    %v754 = vadd.f32 %v752, %v753
    %v755 = vtanh.pop %v754
    %v756 = vmul.f32 %v751, %v755
    %757 = vst [vmem:[#allocation3] sm:$0xff] %v756
    %s758 = scalar_lea.vmem [#allocation2], 32
    %v759 = vld [vmem:[%s758] sm:$0xff]
    %v760 = vld [vmem:[%s758 + $0x8] sm:$0xff]
    %v761 = vld [vmem:[%s758 + $0x10] sm:$0xff]
    %v762 = vld [vmem:[%s758 + $0x18] sm:$0xff]
    %v763 = vadd.f32 %v759, %v400
    %v764 = vadd.f32 %v760, %v402
    %v765 = vadd.f32 %v761, %v441
    %v766 = vadd.f32 %v762, %v443
    %v767 = vpack.c.bf16 %v756, %v756
    %768 = vmatprep.subr.bf16.mxu0 %v584
    %769 = vmatpush1.bf16.msra.mxu0 %v583
    %770 = vmatprep.subr.bf16.mxu0 %v588
    %771 = vmatpush1.bf16.msra.mxu0 %v587
    %772 = vmatprep.subr.bf16.mxu0 %v592
    %773 = vmatpush1.bf16.msra.mxu0 %v591
    %774 = vmatprep.subr.bf16.mxu0 %v596
    %775 = vmatpush1.bf16.msra.mxu0 %v595
    %776 = vmatprep.subr.bf16.mxu0 %v600
    %777 = vmatpush1.bf16.msra.mxu0 %v599
    %778 = vmatprep.subr.bf16.mxu0 %v604
    %779 = vmatpush1.bf16.msra.mxu0 %v603
    %780 = vmatprep.subr.bf16.mxu0 %v608
    %781 = vmatpush1.bf16.msra.mxu0 %v607
    %782 = vmatprep.subr.bf16.mxu0 %v612
    %783 = vmatpush1.bf16.msra.mxu0 %v611
    %784 = vmatprep.subr.bf16.mxu0 0
    %785 = vmatpush1.bf16.msra.mxu0 0
    %786 = vmatprep.subr.bf16.mxu0 0
    %787 = vmatpush1.bf16.msra.mxu0 0
    %788 = vmatprep.subr.bf16.mxu0 0
    %789 = vmatpush1.bf16.msra.mxu0 0
    %790 = vmatprep.subr.bf16.mxu0 0
    %791 = vmatpush1.bf16.msra.mxu0 0
    %792 = vmatprep.subr.bf16.mxu0 0
    %793 = vmatpush1.bf16.msra.mxu0 0
    %794 = vmatprep.subr.bf16.mxu0 0
    %795 = vmatpush1.bf16.msra.mxu0 0
    %796 = vmatprep.subr.bf16.mxu0 0
    %797 = vmatpush1.bf16.msra.mxu0 0
    %798 = vmatprep.subr.bf16.mxu0 0
    %799 = vmatpush1.bf16.msra.mxu0 0
    %800 = vmatprep.mubr.bf16.mxu0 0
    %801 = vmatmul.mubr.bf16.gmra.mrb[0].mxu0 %v767
    %v802 = vpop.f32.mrb[0].mxu0
    %v803 = vadd.f32 0.0, %v802
    %v804 = vpop.f32.mrb[0].mxu0
    %v805 = vadd.f32 0.0, %v804
    %v806 = vpop.f32.mrb[0].mxu0
    %v807 = vpop.f32.mrb[0].mxu0
    %808 = vdwg.mxu0
    %809 = vmatprep.subr.bf16.mxu0 %v586
    %810 = vmatpush1.bf16.msra.mxu0 %v585
    %811 = vmatprep.subr.bf16.mxu0 %v590
    %812 = vmatpush1.bf16.msra.mxu0 %v589
    %813 = vmatprep.subr.bf16.mxu0 %v594
    %814 = vmatpush1.bf16.msra.mxu0 %v593
    %815 = vmatprep.subr.bf16.mxu0 %v598
    %816 = vmatpush1.bf16.msra.mxu0 %v597
    %817 = vmatprep.subr.bf16.mxu0 %v602
    %818 = vmatpush1.bf16.msra.mxu0 %v601
    %819 = vmatprep.subr.bf16.mxu0 %v606
    %820 = vmatpush1.bf16.msra.mxu0 %v605
    %821 = vmatprep.subr.bf16.mxu0 %v610
    %822 = vmatpush1.bf16.msra.mxu0 %v609
    %823 = vmatprep.subr.bf16.mxu0 %v614
    %824 = vmatpush1.bf16.msra.mxu0 %v613
    %825 = vmatprep.subr.bf16.mxu0 0
    %826 = vmatpush1.bf16.msra.mxu0 0
    %827 = vmatprep.subr.bf16.mxu0 0
    %828 = vmatpush1.bf16.msra.mxu0 0
    %829 = vmatprep.subr.bf16.mxu0 0
    %830 = vmatpush1.bf16.msra.mxu0 0
    %831 = vmatprep.subr.bf16.mxu0 0
    %832 = vmatpush1.bf16.msra.mxu0 0
    %833 = vmatprep.subr.bf16.mxu0 0
    %834 = vmatpush1.bf16.msra.mxu0 0
    %835 = vmatprep.subr.bf16.mxu0 0
    %836 = vmatpush1.bf16.msra.mxu0 0
    %837 = vmatprep.subr.bf16.mxu0 0
    %838 = vmatpush1.bf16.msra.mxu0 0
    %839 = vmatprep.subr.bf16.mxu0 0
    %840 = vmatpush1.bf16.msra.mxu0 0
    %841 = vmatprep.mubr.bf16.mxu0 0
    %842 = vmatmul.mubr.bf16.gmra.mrb[0].mxu0 %v767
    %v843 = vpop.f32.mrb[0].mxu0
    %v844 = vadd.f32 0.0, %v843
    %v845 = vpop.f32.mrb[0].mxu0
    %v846 = vadd.f32 0.0, %v845
    %v847 = vpop.f32.mrb[0].mxu0
    %v848 = vpop.f32.mrb[0].mxu0
    %849 = vdwg.mxu0
    %v850 = vadd.f32 %v763, %v803
    %v851 = vadd.f32 %v764, %v805
    %v852 = vadd.f32 %v765, %v844
    %v853 = vadd.f32 %v766, %v846
    %v854 = vxor.u32 %v850, 2147483648
    %v855 = vxor.u32 %v851, 2147483648
    %v856 = vmul.f32 %v854, 1.442695
    %v857 = vpow.pop %v856
    %v858 = vmul.f32 %v855, 1.442695
    %v859 = vpow.pop %v858
    %v860 = vadd.f32 %v857, 1.0
    %v861 = vadd.f32 %v859, 1.0
    %v862 = vrcp.pop %v860
    %v863 = vmul.f32 1.0, %v862
    %v864 = vrcp.pop %v861
    %v865 = vmul.f32 1.0, %v864
    %v866 = vtanh.pop %v852
    %v867 = vxor.u32 %v853, 2147483648
    %v868 = vmul.f32 %v867, 1.442695
    %v869 = vpow.pop %v868
    %v870 = vadd.f32 %v869, 1.0
    %v871 = vrcp.pop %v870
    %v872 = vmul.f32 1.0, %v871
    %v873 = vmul.f32 %v865, %v754
    %v874 = vmul.f32 %v863, %v866
    %v875 = vadd.f32 %v873, %v874
    %v876 = vtanh.pop %v875
    %v877 = vmul.f32 %v872, %v876
    %s878 = scalar_lea.vmem [#allocation3], 8
    %879 = vst [vmem:[%s878] sm:$0xff] %v877
    %s880 = scalar_lea.vmem [#allocation2], 64
    %v881 = vld [vmem:[%s880] sm:$0xff]
    %v882 = vld [vmem:[%s880 + $0x8] sm:$0xff]
    %v883 = vld [vmem:[%s880 + $0x10] sm:$0xff]
    %v884 = vld [vmem:[%s880 + $0x18] sm:$0xff]
    %v885 = vadd.f32 %v881, %v400
    %v886 = vadd.f32 %v882, %v402
    %v887 = vadd.f32 %v883, %v441
    %v888 = vadd.f32 %v884, %v443
    %v889 = vpack.c.bf16 %v877, %v877
    %890 = vmatprep.subr.bf16.mxu0 %v584
    %891 = vmatpush1.bf16.msra.mxu0 %v583
    %892 = vmatprep.subr.bf16.mxu0 %v588
    %893 = vmatpush1.bf16.msra.mxu0 %v587
    %894 = vmatprep.subr.bf16.mxu0 %v592
    %895 = vmatpush1.bf16.msra.mxu0 %v591
    %896 = vmatprep.subr.bf16.mxu0 %v596
    %897 = vmatpush1.bf16.msra.mxu0 %v595
    %898 = vmatprep.subr.bf16.mxu0 %v600
    %899 = vmatpush1.bf16.msra.mxu0 %v599
    %900 = vmatprep.subr.bf16.mxu0 %v604
    %901 = vmatpush1.bf16.msra.mxu0 %v603
    %902 = vmatprep.subr.bf16.mxu0 %v608
    %903 = vmatpush1.bf16.msra.mxu0 %v607
    %904 = vmatprep.subr.bf16.mxu0 %v612
    %905 = vmatpush1.bf16.msra.mxu0 %v611
    %906 = vmatprep.subr.bf16.mxu0 0
    %907 = vmatpush1.bf16.msra.mxu0 0
    %908 = vmatprep.subr.bf16.mxu0 0
    %909 = vmatpush1.bf16.msra.mxu0 0
    %910 = vmatprep.subr.bf16.mxu0 0
    %911 = vmatpush1.bf16.msra.mxu0 0
    %912 = vmatprep.subr.bf16.mxu0 0
    %913 = vmatpush1.bf16.msra.mxu0 0
    %914 = vmatprep.subr.bf16.mxu0 0
    %915 = vmatpush1.bf16.msra.mxu0 0
    %916 = vmatprep.subr.bf16.mxu0 0
    %917 = vmatpush1.bf16.msra.mxu0 0
    %918 = vmatprep.subr.bf16.mxu0 0
    %919 = vmatpush1.bf16.msra.mxu0 0
    %920 = vmatprep.subr.bf16.mxu0 0
    %921 = vmatpush1.bf16.msra.mxu0 0
    %922 = vmatprep.mubr.bf16.mxu0 0
    %923 = vmatmul.mubr.bf16.gmra.mrb[0].mxu0 %v889
    %v924 = vpop.f32.mrb[0].mxu0
    %v925 = vadd.f32 0.0, %v924
    %v926 = vpop.f32.mrb[0].mxu0
    %v927 = vadd.f32 0.0, %v926
    %v928 = vpop.f32.mrb[0].mxu0
    %v929 = vpop.f32.mrb[0].mxu0
    %930 = vdwg.mxu0
    %931 = vmatprep.subr.bf16.mxu0 %v586
    %932 = vmatpush1.bf16.msra.mxu0 %v585
    %933 = vmatprep.subr.bf16.mxu0 %v590
    %934 = vmatpush1.bf16.msra.mxu0 %v589
    %935 = vmatprep.subr.bf16.mxu0 %v594
    %936 = vmatpush1.bf16.msra.mxu0 %v593
    %937 = vmatprep.subr.bf16.mxu0 %v598
    %938 = vmatpush1.bf16.msra.mxu0 %v597
    %939 = vmatprep.subr.bf16.mxu0 %v602
    %940 = vmatpush1.bf16.msra.mxu0 %v601
    %941 = vmatprep.subr.bf16.mxu0 %v606
    %942 = vmatpush1.bf16.msra.mxu0 %v605
    %943 = vmatprep.subr.bf16.mxu0 %v610
    %944 = vmatpush1.bf16.msra.mxu0 %v609
    %945 = vmatprep.subr.bf16.mxu0 %v614
    %946 = vmatpush1.bf16.msra.mxu0 %v613
    %947 = vmatprep.subr.bf16.mxu0 0
    %948 = vmatpush1.bf16.msra.mxu0 0
    %949 = vmatprep.subr.bf16.mxu0 0
    %950 = vmatpush1.bf16.msra.mxu0 0
    %951 = vmatprep.subr.bf16.mxu0 0
    %952 = vmatpush1.bf16.msra.mxu0 0
    %953 = vmatprep.subr.bf16.mxu0 0
    %954 = vmatpush1.bf16.msra.mxu0 0
    %955 = vmatprep.subr.bf16.mxu0 0
    %956 = vmatpush1.bf16.msra.mxu0 0
    %957 = vmatprep.subr.bf16.mxu0 0
    %958 = vmatpush1.bf16.msra.mxu0 0
    %959 = vmatprep.subr.bf16.mxu0 0
    %960 = vmatpush1.bf16.msra.mxu0 0
    %961 = vmatprep.subr.bf16.mxu0 0
    %962 = vmatpush1.bf16.msra.mxu0 0
    %963 = vmatprep.mubr.bf16.mxu0 0
    %964 = vmatmul.mubr.bf16.gmra.mrb[0].mxu0 %v889
    %v965 = vpop.f32.mrb[0].mxu0
    %v966 = vadd.f32 0.0, %v965
    %v967 = vpop.f32.mrb[0].mxu0
    %v968 = vadd.f32 0.0, %v967
    %v969 = vpop.f32.mrb[0].mxu0
    %v970 = vpop.f32.mrb[0].mxu0
    %971 = vdwg.mxu0
    %v972 = vadd.f32 %v885, %v925
    %v973 = vadd.f32 %v886, %v927
    %v974 = vadd.f32 %v887, %v966
    %v975 = vadd.f32 %v888, %v968
    %v976 = vxor.u32 %v972, 2147483648
    %v977 = vxor.u32 %v973, 2147483648
    %v978 = vmul.f32 %v976, 1.442695
    %v979 = vpow.pop %v978
    %v980 = vmul.f32 %v977, 1.442695
    %v981 = vpow.pop %v980
    %v982 = vadd.f32 %v979, 1.0
    %v983 = vadd.f32 %v981, 1.0
    %v984 = vrcp.pop %v982
    %v985 = vmul.f32 1.0, %v984
    %v986 = vrcp.pop %v983
    %v987 = vmul.f32 1.0, %v986
    %v988 = vtanh.pop %v974
    %v989 = vxor.u32 %v975, 2147483648
    %v990 = vmul.f32 %v989, 1.442695
    %v991 = vpow.pop %v990
    %v992 = vadd.f32 %v991, 1.0
    %v993 = vrcp.pop %v992
    %v994 = vmul.f32 1.0, %v993
    %v995 = vmul.f32 %v987, %v875
    %v996 = vmul.f32 %v985, %v988
    %v997 = vadd.f32 %v995, %v996
    %v998 = vtanh.pop %v997
    %v999 = vmul.f32 %v994, %v998
    %s1000 = scalar_lea.vmem [#allocation3], 16
    %1001 = vst [vmem:[%s1000] sm:$0xff] %v999
    %s1002 = scalar_lea.vmem [#allocation2], 96
    %v1003 = vld [vmem:[%s1002] sm:$0xff]
    %v1004 = vld [vmem:[%s1002 + $0x8] sm:$0xff]
    %v1005 = vld [vmem:[%s1002 + $0x10] sm:$0xff]
    %v1006 = vld [vmem:[%s1002 + $0x18] sm:$0xff]
    %v1007 = vadd.f32 %v1003, %v400
    %v1008 = vadd.f32 %v1004, %v402
    %v1009 = vadd.f32 %v1005, %v441
    %v1010 = vadd.f32 %v1006, %v443
    %v1011 = vpack.c.bf16 %v999, %v999
    %1012 = vmatprep.subr.bf16.mxu0 %v584
    %1013 = vmatpush1.bf16.msra.mxu0 %v583
    %1014 = vmatprep.subr.bf16.mxu0 %v588
    %1015 = vmatpush1.bf16.msra.mxu0 %v587
    %1016 = vmatprep.subr.bf16.mxu0 %v592
    %1017 = vmatpush1.bf16.msra.mxu0 %v591
    %1018 = vmatprep.subr.bf16.mxu0 %v596
    %1019 = vmatpush1.bf16.msra.mxu0 %v595
    %1020 = vmatprep.subr.bf16.mxu0 %v600
    %1021 = vmatpush1.bf16.msra.mxu0 %v599
    %1022 = vmatprep.subr.bf16.mxu0 %v604
    %1023 = vmatpush1.bf16.msra.mxu0 %v603
    %1024 = vmatprep.subr.bf16.mxu0 %v608
    %1025 = vmatpush1.bf16.msra.mxu0 %v607
    %1026 = vmatprep.subr.bf16.mxu0 %v612
    %1027 = vmatpush1.bf16.msra.mxu0 %v611
    %1028 = vmatprep.subr.bf16.mxu0 0
    %1029 = vmatpush1.bf16.msra.mxu0 0
    %1030 = vmatprep.subr.bf16.mxu0 0
    %1031 = vmatpush1.bf16.msra.mxu0 0
    %1032 = vmatprep.subr.bf16.mxu0 0
    %1033 = vmatpush1.bf16.msra.mxu0 0
    %1034 = vmatprep.subr.bf16.mxu0 0
    %1035 = vmatpush1.bf16.msra.mxu0 0
    %1036 = vmatprep.subr.bf16.mxu0 0
    %1037 = vmatpush1.bf16.msra.mxu0 0
    %1038 = vmatprep.subr.bf16.mxu0 0
    %1039 = vmatpush1.bf16.msra.mxu0 0
    %1040 = vmatprep.subr.bf16.mxu0 0
    %1041 = vmatpush1.bf16.msra.mxu0 0
    %1042 = vmatprep.subr.bf16.mxu0 0
    %1043 = vmatpush1.bf16.msra.mxu0 0
    %1044 = vmatprep.mubr.bf16.mxu0 0
    %1045 = vmatmul.mubr.bf16.gmra.mrb[0].mxu0 %v1011
    %v1046 = vpop.f32.mrb[0].mxu0
    %v1047 = vadd.f32 0.0, %v1046
    %v1048 = vpop.f32.mrb[0].mxu0
    %v1049 = vadd.f32 0.0, %v1048
    %v1050 = vpop.f32.mrb[0].mxu0
    %v1051 = vpop.f32.mrb[0].mxu0
    %1052 = vdwg.mxu0
    %1053 = vmatprep.subr.bf16.mxu0 %v586
    %1054 = vmatpush1.bf16.msra.mxu0 %v585
    %1055 = vmatprep.subr.bf16.mxu0 %v590
    %1056 = vmatpush1.bf16.msra.mxu0 %v589
    %1057 = vmatprep.subr.bf16.mxu0 %v594
    %1058 = vmatpush1.bf16.msra.mxu0 %v593
    %1059 = vmatprep.subr.bf16.mxu0 %v598
    %1060 = vmatpush1.bf16.msra.mxu0 %v597
    %1061 = vmatprep.subr.bf16.mxu0 %v602
    %1062 = vmatpush1.bf16.msra.mxu0 %v601
    %1063 = vmatprep.subr.bf16.mxu0 %v606
    %1064 = vmatpush1.bf16.msra.mxu0 %v605
    %1065 = vmatprep.subr.bf16.mxu0 %v610
    %1066 = vmatpush1.bf16.msra.mxu0 %v609
    %1067 = vmatprep.subr.bf16.mxu0 %v614
    %1068 = vmatpush1.bf16.msra.mxu0 %v613
    %1069 = vmatprep.subr.bf16.mxu0 0
    %1070 = vmatpush1.bf16.msra.mxu0 0
    %1071 = vmatprep.subr.bf16.mxu0 0
    %1072 = vmatpush1.bf16.msra.mxu0 0
    %1073 = vmatprep.subr.bf16.mxu0 0
    %1074 = vmatpush1.bf16.msra.mxu0 0
    %1075 = vmatprep.subr.bf16.mxu0 0
    %1076 = vmatpush1.bf16.msra.mxu0 0
    %1077 = vmatprep.subr.bf16.mxu0 0
    %1078 = vmatpush1.bf16.msra.mxu0 0
    %1079 = vmatprep.subr.bf16.mxu0 0
    %1080 = vmatpush1.bf16.msra.mxu0 0
    %1081 = vmatprep.subr.bf16.mxu0 0
    %1082 = vmatpush1.bf16.msra.mxu0 0
    %1083 = vmatprep.subr.bf16.mxu0 0
    %1084 = vmatpush1.bf16.msra.mxu0 0
    %1085 = vmatprep.mubr.bf16.mxu0 0
    %1086 = vmatmul.mubr.bf16.gmra.mrb[0].mxu0 %v1011
    %v1087 = vpop.f32.mrb[0].mxu0
    %v1088 = vadd.f32 0.0, %v1087
    %v1089 = vpop.f32.mrb[0].mxu0
    %v1090 = vadd.f32 0.0, %v1089
    %v1091 = vpop.f32.mrb[0].mxu0
    %v1092 = vpop.f32.mrb[0].mxu0
    %1093 = vdwg.mxu0
    %v1094 = vadd.f32 %v1007, %v1047
    %v1095 = vadd.f32 %v1008, %v1049
    %v1096 = vadd.f32 %v1009, %v1088
    %v1097 = vadd.f32 %v1010, %v1090
    %v1098 = vxor.u32 %v1094, 2147483648
    %v1099 = vxor.u32 %v1095, 2147483648
    %v1100 = vmul.f32 %v1098, 1.442695
    %v1101 = vpow.pop %v1100
    %v1102 = vmul.f32 %v1099, 1.442695
    %v1103 = vpow.pop %v1102
    %v1104 = vadd.f32 %v1101, 1.0
    %v1105 = vadd.f32 %v1103, 1.0
    %v1106 = vrcp.pop %v1104
    %v1107 = vmul.f32 1.0, %v1106
    %v1108 = vrcp.pop %v1105
    %v1109 = vmul.f32 1.0, %v1108
    %v1110 = vtanh.pop %v1096
    %v1111 = vxor.u32 %v1097, 2147483648
    %v1112 = vmul.f32 %v1111, 1.442695
    %v1113 = vpow.pop %v1112
    %v1114 = vadd.f32 %v1113, 1.0
    %v1115 = vrcp.pop %v1114
    %v1116 = vmul.f32 1.0, %v1115
    %v1117 = vmul.f32 %v1109, %v997
    %v1118 = vmul.f32 %v1107, %v1110
    %v1119 = vadd.f32 %v1117, %v1118
    %v1120 = vtanh.pop %v1119
    %v1121 = vmul.f32 %v1116, %v1120
    %s1122 = scalar_lea.vmem [#allocation3], 24
    %1123 = vst [vmem:[%s1122] sm:$0xff] %v1121
    %s1124 = scalar_lea.vmem [#allocation2], 128
    %v1125 = vld [vmem:[%s1124] sm:$0xff]
    %v1126 = vld [vmem:[%s1124 + $0x8] sm:$0xff]
    %v1127 = vld [vmem:[%s1124 + $0x10] sm:$0xff]
    %v1128 = vld [vmem:[%s1124 + $0x18] sm:$0xff]
    %v1129 = vadd.f32 %v1125, %v400
    %v1130 = vadd.f32 %v1126, %v402
    %v1131 = vadd.f32 %v1127, %v441
    %v1132 = vadd.f32 %v1128, %v443
    %v1133 = vpack.c.bf16 %v1121, %v1121
    %1134 = vmatprep.subr.bf16.mxu0 %v584
    %1135 = vmatpush1.bf16.msra.mxu0 %v583
    %1136 = vmatprep.subr.bf16.mxu0 %v588
    %1137 = vmatpush1.bf16.msra.mxu0 %v587
    %1138 = vmatprep.subr.bf16.mxu0 %v592
    %1139 = vmatpush1.bf16.msra.mxu0 %v591
    %1140 = vmatprep.subr.bf16.mxu0 %v596
    %1141 = vmatpush1.bf16.msra.mxu0 %v595
    %1142 = vmatprep.subr.bf16.mxu0 %v600
    %1143 = vmatpush1.bf16.msra.mxu0 %v599
    %1144 = vmatprep.subr.bf16.mxu0 %v604
    %1145 = vmatpush1.bf16.msra.mxu0 %v603
    %1146 = vmatprep.subr.bf16.mxu0 %v608
    %1147 = vmatpush1.bf16.msra.mxu0 %v607
    %1148 = vmatprep.subr.bf16.mxu0 %v612
    %1149 = vmatpush1.bf16.msra.mxu0 %v611
    %1150 = vmatprep.subr.bf16.mxu0 0
    %1151 = vmatpush1.bf16.msra.mxu0 0
    %1152 = vmatprep.subr.bf16.mxu0 0
    %1153 = vmatpush1.bf16.msra.mxu0 0
    %1154 = vmatprep.subr.bf16.mxu0 0
    %1155 = vmatpush1.bf16.msra.mxu0 0
    %1156 = vmatprep.subr.bf16.mxu0 0
    %1157 = vmatpush1.bf16.msra.mxu0 0
    %1158 = vmatprep.subr.bf16.mxu0 0
    %1159 = vmatpush1.bf16.msra.mxu0 0
    %1160 = vmatprep.subr.bf16.mxu0 0
    %1161 = vmatpush1.bf16.msra.mxu0 0
    %1162 = vmatprep.subr.bf16.mxu0 0
    %1163 = vmatpush1.bf16.msra.mxu0 0
    %1164 = vmatprep.subr.bf16.mxu0 0
    %1165 = vmatpush1.bf16.msra.mxu0 0
    %1166 = vmatprep.mubr.bf16.mxu0 0
    %1167 = vmatmul.mubr.bf16.gmra.mrb[0].mxu0 %v1133
    %v1168 = vpop.f32.mrb[0].mxu0
    %v1169 = vadd.f32 0.0, %v1168
    %v1170 = vpop.f32.mrb[0].mxu0
    %v1171 = vadd.f32 0.0, %v1170
    %v1172 = vpop.f32.mrb[0].mxu0
    %v1173 = vpop.f32.mrb[0].mxu0
    %1174 = vdwg.mxu0
    %1175 = vmatprep.subr.bf16.mxu0 %v586
    %1176 = vmatpush1.bf16.msra.mxu0 %v585
    %1177 = vmatprep.subr.bf16.mxu0 %v590
    %1178 = vmatpush1.bf16.msra.mxu0 %v589
    %1179 = vmatprep.subr.bf16.mxu0 %v594
    %1180 = vmatpush1.bf16.msra.mxu0 %v593
    %1181 = vmatprep.subr.bf16.mxu0 %v598
    %1182 = vmatpush1.bf16.msra.mxu0 %v597
    %1183 = vmatprep.subr.bf16.mxu0 %v602
    %1184 = vmatpush1.bf16.msra.mxu0 %v601
    %1185 = vmatprep.subr.bf16.mxu0 %v606
    %1186 = vmatpush1.bf16.msra.mxu0 %v605
    %1187 = vmatprep.subr.bf16.mxu0 %v610
    %1188 = vmatpush1.bf16.msra.mxu0 %v609
    %1189 = vmatprep.subr.bf16.mxu0 %v614
    %1190 = vmatpush1.bf16.msra.mxu0 %v613
    %1191 = vmatprep.subr.bf16.mxu0 0
    %1192 = vmatpush1.bf16.msra.mxu0 0
    %1193 = vmatprep.subr.bf16.mxu0 0
    %1194 = vmatpush1.bf16.msra.mxu0 0
    %1195 = vmatprep.subr.bf16.mxu0 0
    %1196 = vmatpush1.bf16.msra.mxu0 0
    %1197 = vmatprep.subr.bf16.mxu0 0
    %1198 = vmatpush1.bf16.msra.mxu0 0
    %1199 = vmatprep.subr.bf16.mxu0 0
    %1200 = vmatpush1.bf16.msra.mxu0 0
    %1201 = vmatprep.subr.bf16.mxu0 0
    %1202 = vmatpush1.bf16.msra.mxu0 0
    %1203 = vmatprep.subr.bf16.mxu0 0
    %1204 = vmatpush1.bf16.msra.mxu0 0
    %1205 = vmatprep.subr.bf16.mxu0 0
    %1206 = vmatpush1.bf16.msra.mxu0 0
    %1207 = vmatprep.mubr.bf16.mxu0 0
    %1208 = vmatmul.mubr.bf16.gmra.mrb[0].mxu0 %v1133
    %v1209 = vpop.f32.mrb[0].mxu0
    %v1210 = vadd.f32 0.0, %v1209
    %v1211 = vpop.f32.mrb[0].mxu0
    %v1212 = vadd.f32 0.0, %v1211
    %v1213 = vpop.f32.mrb[0].mxu0
    %v1214 = vpop.f32.mrb[0].mxu0
    %1215 = vdwg.mxu0
    %v1216 = vadd.f32 %v1129, %v1169
    %v1217 = vadd.f32 %v1130, %v1171
    %v1218 = vadd.f32 %v1131, %v1210
    %v1219 = vadd.f32 %v1132, %v1212
    %v1220 = vxor.u32 %v1216, 2147483648
    %v1221 = vxor.u32 %v1217, 2147483648
    %v1222 = vmul.f32 %v1220, 1.442695
    %v1223 = vpow.pop %v1222
    %v1224 = vmul.f32 %v1221, 1.442695
    %v1225 = vpow.pop %v1224
    %v1226 = vadd.f32 %v1223, 1.0
    %v1227 = vadd.f32 %v1225, 1.0
    %v1228 = vrcp.pop %v1226
    %v1229 = vmul.f32 1.0, %v1228
    %v1230 = vrcp.pop %v1227
    %v1231 = vmul.f32 1.0, %v1230
    %v1232 = vtanh.pop %v1218
    %v1233 = vxor.u32 %v1219, 2147483648
    %v1234 = vmul.f32 %v1233, 1.442695
    %v1235 = vpow.pop %v1234
    %v1236 = vadd.f32 %v1235, 1.0
    %v1237 = vrcp.pop %v1236
    %v1238 = vmul.f32 1.0, %v1237
    %v1239 = vmul.f32 %v1231, %v1119
    %v1240 = vmul.f32 %v1229, %v1232
    %v1241 = vadd.f32 %v1239, %v1240
    %v1242 = vtanh.pop %v1241
    %v1243 = vmul.f32 %v1238, %v1242
    %s1244 = scalar_lea.vmem [#allocation3], 32
    %1245 = vst [vmem:[%s1244] sm:$0xff] %v1243
    %s1246 = scalar_lea.vmem [#allocation2], 160
    %v1247 = vld [vmem:[%s1246] sm:$0xff]
    %v1248 = vld [vmem:[%s1246 + $0x8] sm:$0xff]
    %v1249 = vld [vmem:[%s1246 + $0x10] sm:$0xff]
    %v1250 = vld [vmem:[%s1246 + $0x18] sm:$0xff]
    %v1251 = vadd.f32 %v1247, %v400
    %v1252 = vadd.f32 %v1248, %v402
    %v1253 = vadd.f32 %v1249, %v441
    %v1254 = vadd.f32 %v1250, %v443
    %v1255 = vpack.c.bf16 %v1243, %v1243
    %1256 = vmatprep.subr.bf16.mxu0 %v584
    %1257 = vmatpush1.bf16.msra.mxu0 %v583
    %1258 = vmatprep.subr.bf16.mxu0 %v588
    %1259 = vmatpush1.bf16.msra.mxu0 %v587
    %1260 = vmatprep.subr.bf16.mxu0 %v592
    %1261 = vmatpush1.bf16.msra.mxu0 %v591
    %1262 = vmatprep.subr.bf16.mxu0 %v596
    %1263 = vmatpush1.bf16.msra.mxu0 %v595
    %1264 = vmatprep.subr.bf16.mxu0 %v600
    %1265 = vmatpush1.bf16.msra.mxu0 %v599
    %1266 = vmatprep.subr.bf16.mxu0 %v604
    %1267 = vmatpush1.bf16.msra.mxu0 %v603
    %1268 = vmatprep.subr.bf16.mxu0 %v608
    %1269 = vmatpush1.bf16.msra.mxu0 %v607
    %1270 = vmatprep.subr.bf16.mxu0 %v612
    %1271 = vmatpush1.bf16.msra.mxu0 %v611
    %1272 = vmatprep.subr.bf16.mxu0 0
    %1273 = vmatpush1.bf16.msra.mxu0 0
    %1274 = vmatprep.subr.bf16.mxu0 0
    %1275 = vmatpush1.bf16.msra.mxu0 0
    %1276 = vmatprep.subr.bf16.mxu0 0
    %1277 = vmatpush1.bf16.msra.mxu0 0
    %1278 = vmatprep.subr.bf16.mxu0 0
    %1279 = vmatpush1.bf16.msra.mxu0 0
    %1280 = vmatprep.subr.bf16.mxu0 0
    %1281 = vmatpush1.bf16.msra.mxu0 0
    %1282 = vmatprep.subr.bf16.mxu0 0
    %1283 = vmatpush1.bf16.msra.mxu0 0
    %1284 = vmatprep.subr.bf16.mxu0 0
    %1285 = vmatpush1.bf16.msra.mxu0 0
    %1286 = vmatprep.subr.bf16.mxu0 0
    %1287 = vmatpush1.bf16.msra.mxu0 0
    %1288 = vmatprep.mubr.bf16.mxu0 0
    %1289 = vmatmul.mubr.bf16.gmra.mrb[0].mxu0 %v1255
    %v1290 = vpop.f32.mrb[0].mxu0
    %v1291 = vadd.f32 0.0, %v1290
    %v1292 = vpop.f32.mrb[0].mxu0
    %v1293 = vadd.f32 0.0, %v1292
    %v1294 = vpop.f32.mrb[0].mxu0
    %v1295 = vpop.f32.mrb[0].mxu0
    %1296 = vdwg.mxu0
    %1297 = vmatprep.subr.bf16.mxu0 %v586
    %1298 = vmatpush1.bf16.msra.mxu0 %v585
    %1299 = vmatprep.subr.bf16.mxu0 %v590
    %1300 = vmatpush1.bf16.msra.mxu0 %v589
    %1301 = vmatprep.subr.bf16.mxu0 %v594
    %1302 = vmatpush1.bf16.msra.mxu0 %v593
    %1303 = vmatprep.subr.bf16.mxu0 %v598
    %1304 = vmatpush1.bf16.msra.mxu0 %v597
    %1305 = vmatprep.subr.bf16.mxu0 %v602
    %1306 = vmatpush1.bf16.msra.mxu0 %v601
    %1307 = vmatprep.subr.bf16.mxu0 %v606
    %1308 = vmatpush1.bf16.msra.mxu0 %v605
    %1309 = vmatprep.subr.bf16.mxu0 %v610
    %1310 = vmatpush1.bf16.msra.mxu0 %v609
    %1311 = vmatprep.subr.bf16.mxu0 %v614
    %1312 = vmatpush1.bf16.msra.mxu0 %v613
    %1313 = vmatprep.subr.bf16.mxu0 0
    %1314 = vmatpush1.bf16.msra.mxu0 0
    %1315 = vmatprep.subr.bf16.mxu0 0
    %1316 = vmatpush1.bf16.msra.mxu0 0
    %1317 = vmatprep.subr.bf16.mxu0 0
    %1318 = vmatpush1.bf16.msra.mxu0 0
    %1319 = vmatprep.subr.bf16.mxu0 0
    %1320 = vmatpush1.bf16.msra.mxu0 0
    %1321 = vmatprep.subr.bf16.mxu0 0
    %1322 = vmatpush1.bf16.msra.mxu0 0
    %1323 = vmatprep.subr.bf16.mxu0 0
    %1324 = vmatpush1.bf16.msra.mxu0 0
    %1325 = vmatprep.subr.bf16.mxu0 0
    %1326 = vmatpush1.bf16.msra.mxu0 0
    %1327 = vmatprep.subr.bf16.mxu0 0
    %1328 = vmatpush1.bf16.msra.mxu0 0
    %1329 = vmatprep.mubr.bf16.mxu0 0
    %1330 = vmatmul.mubr.bf16.gmra.mrb[0].mxu0 %v1255
    %v1331 = vpop.f32.mrb[0].mxu0
    %v1332 = vadd.f32 0.0, %v1331
    %v1333 = vpop.f32.mrb[0].mxu0
    %v1334 = vadd.f32 0.0, %v1333
    %v1335 = vpop.f32.mrb[0].mxu0
    %v1336 = vpop.f32.mrb[0].mxu0
    %1337 = vdwg.mxu0
    %v1338 = vadd.f32 %v1251, %v1291
    %v1339 = vadd.f32 %v1252, %v1293
    %v1340 = vadd.f32 %v1253, %v1332
    %v1341 = vadd.f32 %v1254, %v1334
    %v1342 = vxor.u32 %v1338, 2147483648
    %v1343 = vxor.u32 %v1339, 2147483648
    %v1344 = vmul.f32 %v1342, 1.442695
    %v1345 = vpow.pop %v1344
    %v1346 = vmul.f32 %v1343, 1.442695
    %v1347 = vpow.pop %v1346
    %v1348 = vadd.f32 %v1345, 1.0
    %v1349 = vadd.f32 %v1347, 1.0
    %v1350 = vrcp.pop %v1348
    %v1351 = vmul.f32 1.0, %v1350
    %v1352 = vrcp.pop %v1349
    %v1353 = vmul.f32 1.0, %v1352
    %v1354 = vtanh.pop %v1340
    %v1355 = vxor.u32 %v1341, 2147483648
    %v1356 = vmul.f32 %v1355, 1.442695
    %v1357 = vpow.pop %v1356
    %v1358 = vadd.f32 %v1357, 1.0
    %v1359 = vrcp.pop %v1358
    %v1360 = vmul.f32 1.0, %v1359
    %v1361 = vmul.f32 %v1353, %v1241
    %v1362 = vmul.f32 %v1351, %v1354
    %v1363 = vadd.f32 %v1361, %v1362
    %v1364 = vtanh.pop %v1363
    %v1365 = vmul.f32 %v1360, %v1364
    %s1366 = scalar_lea.vmem [#allocation3], 40
    %1367 = vst [vmem:[%s1366] sm:$0xff] %v1365
    %s1368 = scalar_lea.vmem [#allocation2], 192
    %v1369 = vld [vmem:[%s1368] sm:$0xff]
    %v1370 = vld [vmem:[%s1368 + $0x8] sm:$0xff]
    %v1371 = vld [vmem:[%s1368 + $0x10] sm:$0xff]
    %v1372 = vld [vmem:[%s1368 + $0x18] sm:$0xff]
    %v1373 = vadd.f32 %v1369, %v400
    %v1374 = vadd.f32 %v1370, %v402
    %v1375 = vadd.f32 %v1371, %v441
    %v1376 = vadd.f32 %v1372, %v443
    %v1377 = vpack.c.bf16 %v1365, %v1365
    %1378 = vmatprep.subr.bf16.mxu0 %v584
    %1379 = vmatpush1.bf16.msra.mxu0 %v583
    %1380 = vmatprep.subr.bf16.mxu0 %v588
    %1381 = vmatpush1.bf16.msra.mxu0 %v587
    %1382 = vmatprep.subr.bf16.mxu0 %v592
    %1383 = vmatpush1.bf16.msra.mxu0 %v591
    %1384 = vmatprep.subr.bf16.mxu0 %v596
    %1385 = vmatpush1.bf16.msra.mxu0 %v595
    %1386 = vmatprep.subr.bf16.mxu0 %v600
    %1387 = vmatpush1.bf16.msra.mxu0 %v599
    %1388 = vmatprep.subr.bf16.mxu0 %v604
    %1389 = vmatpush1.bf16.msra.mxu0 %v603
    %1390 = vmatprep.subr.bf16.mxu0 %v608
    %1391 = vmatpush1.bf16.msra.mxu0 %v607
    %1392 = vmatprep.subr.bf16.mxu0 %v612
    %1393 = vmatpush1.bf16.msra.mxu0 %v611
    %1394 = vmatprep.subr.bf16.mxu0 0
    %1395 = vmatpush1.bf16.msra.mxu0 0
    %1396 = vmatprep.subr.bf16.mxu0 0
    %1397 = vmatpush1.bf16.msra.mxu0 0
    %1398 = vmatprep.subr.bf16.mxu0 0
    %1399 = vmatpush1.bf16.msra.mxu0 0
    %1400 = vmatprep.subr.bf16.mxu0 0
    %1401 = vmatpush1.bf16.msra.mxu0 0
    %1402 = vmatprep.subr.bf16.mxu0 0
    %1403 = vmatpush1.bf16.msra.mxu0 0
    %1404 = vmatprep.subr.bf16.mxu0 0
    %1405 = vmatpush1.bf16.msra.mxu0 0
    %1406 = vmatprep.subr.bf16.mxu0 0
    %1407 = vmatpush1.bf16.msra.mxu0 0
    %1408 = vmatprep.subr.bf16.mxu0 0
    %1409 = vmatpush1.bf16.msra.mxu0 0
    %1410 = vmatprep.mubr.bf16.mxu0 0
    %1411 = vmatmul.mubr.bf16.gmra.mrb[0].mxu0 %v1377
    %v1412 = vpop.f32.mrb[0].mxu0
    %v1413 = vadd.f32 0.0, %v1412
    %v1414 = vpop.f32.mrb[0].mxu0
    %v1415 = vadd.f32 0.0, %v1414
    %v1416 = vpop.f32.mrb[0].mxu0
    %v1417 = vpop.f32.mrb[0].mxu0
    %1418 = vdwg.mxu0
    %1419 = vmatprep.subr.bf16.mxu0 %v586
    %1420 = vmatpush1.bf16.msra.mxu0 %v585
    %1421 = vmatprep.subr.bf16.mxu0 %v590
    %1422 = vmatpush1.bf16.msra.mxu0 %v589
    %1423 = vmatprep.subr.bf16.mxu0 %v594
    %1424 = vmatpush1.bf16.msra.mxu0 %v593
    %1425 = vmatprep.subr.bf16.mxu0 %v598
    %1426 = vmatpush1.bf16.msra.mxu0 %v597
    %1427 = vmatprep.subr.bf16.mxu0 %v602
    %1428 = vmatpush1.bf16.msra.mxu0 %v601
    %1429 = vmatprep.subr.bf16.mxu0 %v606
    %1430 = vmatpush1.bf16.msra.mxu0 %v605
    %1431 = vmatprep.subr.bf16.mxu0 %v610
    %1432 = vmatpush1.bf16.msra.mxu0 %v609
    %1433 = vmatprep.subr.bf16.mxu0 %v614
    %1434 = vmatpush1.bf16.msra.mxu0 %v613
    %1435 = vmatprep.subr.bf16.mxu0 0
    %1436 = vmatpush1.bf16.msra.mxu0 0
    %1437 = vmatprep.subr.bf16.mxu0 0
    %1438 = vmatpush1.bf16.msra.mxu0 0
    %1439 = vmatprep.subr.bf16.mxu0 0
    %1440 = vmatpush1.bf16.msra.mxu0 0
    %1441 = vmatprep.subr.bf16.mxu0 0
    %1442 = vmatpush1.bf16.msra.mxu0 0
    %1443 = vmatprep.subr.bf16.mxu0 0
    %1444 = vmatpush1.bf16.msra.mxu0 0
    %1445 = vmatprep.subr.bf16.mxu0 0
    %1446 = vmatpush1.bf16.msra.mxu0 0
    %1447 = vmatprep.subr.bf16.mxu0 0
    %1448 = vmatpush1.bf16.msra.mxu0 0
    %1449 = vmatprep.subr.bf16.mxu0 0
    %1450 = vmatpush1.bf16.msra.mxu0 0
    %1451 = vmatprep.mubr.bf16.mxu0 0
    %1452 = vmatmul.mubr.bf16.gmra.mrb[0].mxu0 %v1377
    %v1453 = vpop.f32.mrb[0].mxu0
    %v1454 = vadd.f32 0.0, %v1453
    %v1455 = vpop.f32.mrb[0].mxu0
    %v1456 = vadd.f32 0.0, %v1455
    %v1457 = vpop.f32.mrb[0].mxu0
    %v1458 = vpop.f32.mrb[0].mxu0
    %1459 = vdwg.mxu0
    %v1460 = vadd.f32 %v1373, %v1413
    %v1461 = vadd.f32 %v1374, %v1415
    %v1462 = vadd.f32 %v1375, %v1454
    %v1463 = vadd.f32 %v1376, %v1456
    %v1464 = vxor.u32 %v1460, 2147483648
    %v1465 = vxor.u32 %v1461, 2147483648
    %v1466 = vmul.f32 %v1464, 1.442695
    %v1467 = vpow.pop %v1466
    %v1468 = vmul.f32 %v1465, 1.442695
    %v1469 = vpow.pop %v1468
    %v1470 = vadd.f32 %v1467, 1.0
    %v1471 = vadd.f32 %v1469, 1.0
    %v1472 = vrcp.pop %v1470
    %v1473 = vmul.f32 1.0, %v1472
    %v1474 = vrcp.pop %v1471
    %v1475 = vmul.f32 1.0, %v1474
    %v1476 = vtanh.pop %v1462
    %v1477 = vxor.u32 %v1463, 2147483648
    %v1478 = vmul.f32 %v1477, 1.442695
    %v1479 = vpow.pop %v1478
    %v1480 = vadd.f32 %v1479, 1.0
    %v1481 = vrcp.pop %v1480
    %v1482 = vmul.f32 1.0, %v1481
    %v1483 = vmul.f32 %v1475, %v1363
    %v1484 = vmul.f32 %v1473, %v1476
    %v1485 = vadd.f32 %v1483, %v1484
    %v1486 = vtanh.pop %v1485
    %v1487 = vmul.f32 %v1482, %v1486
    %s1488 = scalar_lea.vmem [#allocation3], 48
    %1489 = vst [vmem:[%s1488] sm:$0xff] %v1487
    %s1490 = scalar_lea.vmem [#allocation2], 224
    %v1491 = vld [vmem:[%s1490] sm:$0xff]
    %v1492 = vld [vmem:[%s1490 + $0x8] sm:$0xff]
    %v1493 = vld [vmem:[%s1490 + $0x10] sm:$0xff]
    %v1494 = vld [vmem:[%s1490 + $0x18] sm:$0xff]
    %v1495 = vadd.f32 %v1491, %v400
    %v1496 = vadd.f32 %v1492, %v402
    %v1497 = vadd.f32 %v1493, %v441
    %v1498 = vadd.f32 %v1494, %v443
    %v1499 = vpack.c.bf16 %v1487, %v1487
    %1500 = vmatprep.subr.bf16.mxu0 %v584
    %1501 = vmatpush1.bf16.msra.mxu0 %v583
    %1502 = vmatprep.subr.bf16.mxu0 %v588
    %1503 = vmatpush1.bf16.msra.mxu0 %v587
    %1504 = vmatprep.subr.bf16.mxu0 %v592
    %1505 = vmatpush1.bf16.msra.mxu0 %v591
    %1506 = vmatprep.subr.bf16.mxu0 %v596
    %1507 = vmatpush1.bf16.msra.mxu0 %v595
    %1508 = vmatprep.subr.bf16.mxu0 %v600
    %1509 = vmatpush1.bf16.msra.mxu0 %v599
    %1510 = vmatprep.subr.bf16.mxu0 %v604
    %1511 = vmatpush1.bf16.msra.mxu0 %v603
    %1512 = vmatprep.subr.bf16.mxu0 %v608
    %1513 = vmatpush1.bf16.msra.mxu0 %v607
    %1514 = vmatprep.subr.bf16.mxu0 %v612
    %1515 = vmatpush1.bf16.msra.mxu0 %v611
    %1516 = vmatprep.subr.bf16.mxu0 0
    %1517 = vmatpush1.bf16.msra.mxu0 0
    %1518 = vmatprep.subr.bf16.mxu0 0
    %1519 = vmatpush1.bf16.msra.mxu0 0
    %1520 = vmatprep.subr.bf16.mxu0 0
    %1521 = vmatpush1.bf16.msra.mxu0 0
    %1522 = vmatprep.subr.bf16.mxu0 0
    %1523 = vmatpush1.bf16.msra.mxu0 0
    %1524 = vmatprep.subr.bf16.mxu0 0
    %1525 = vmatpush1.bf16.msra.mxu0 0
    %1526 = vmatprep.subr.bf16.mxu0 0
    %1527 = vmatpush1.bf16.msra.mxu0 0
    %1528 = vmatprep.subr.bf16.mxu0 0
    %1529 = vmatpush1.bf16.msra.mxu0 0
    %1530 = vmatprep.subr.bf16.mxu0 0
    %1531 = vmatpush1.bf16.msra.mxu0 0
    %1532 = vmatprep.mubr.bf16.mxu0 0
    %1533 = vmatmul.mubr.bf16.gmra.mrb[0].mxu0 %v1499
    %v1534 = vpop.f32.mrb[0].mxu0
    %v1535 = vadd.f32 0.0, %v1534
    %v1536 = vpop.f32.mrb[0].mxu0
    %v1537 = vadd.f32 0.0, %v1536
    %v1538 = vpop.f32.mrb[0].mxu0
    %v1539 = vpop.f32.mrb[0].mxu0
    %1540 = vdwg.mxu0
    %1541 = vmatprep.subr.bf16.mxu0 %v586
    %1542 = vmatpush1.bf16.msra.mxu0 %v585
    %1543 = vmatprep.subr.bf16.mxu0 %v590
    %1544 = vmatpush1.bf16.msra.mxu0 %v589
    %1545 = vmatprep.subr.bf16.mxu0 %v594
    %1546 = vmatpush1.bf16.msra.mxu0 %v593
    %1547 = vmatprep.subr.bf16.mxu0 %v598
    %1548 = vmatpush1.bf16.msra.mxu0 %v597
    %1549 = vmatprep.subr.bf16.mxu0 %v602
    %1550 = vmatpush1.bf16.msra.mxu0 %v601
    %1551 = vmatprep.subr.bf16.mxu0 %v606
    %1552 = vmatpush1.bf16.msra.mxu0 %v605
    %1553 = vmatprep.subr.bf16.mxu0 %v610
    %1554 = vmatpush1.bf16.msra.mxu0 %v609
    %1555 = vmatprep.subr.bf16.mxu0 %v614
    %1556 = vmatpush1.bf16.msra.mxu0 %v613
    %1557 = vmatprep.subr.bf16.mxu0 0
    %1558 = vmatpush1.bf16.msra.mxu0 0
    %1559 = vmatprep.subr.bf16.mxu0 0
    %1560 = vmatpush1.bf16.msra.mxu0 0
    %1561 = vmatprep.subr.bf16.mxu0 0
    %1562 = vmatpush1.bf16.msra.mxu0 0
    %1563 = vmatprep.subr.bf16.mxu0 0
    %1564 = vmatpush1.bf16.msra.mxu0 0
    %1565 = vmatprep.subr.bf16.mxu0 0
    %1566 = vmatpush1.bf16.msra.mxu0 0
    %1567 = vmatprep.subr.bf16.mxu0 0
    %1568 = vmatpush1.bf16.msra.mxu0 0
    %1569 = vmatprep.subr.bf16.mxu0 0
    %1570 = vmatpush1.bf16.msra.mxu0 0
    %1571 = vmatprep.subr.bf16.mxu0 0
    %1572 = vmatpush1.bf16.msra.mxu0 0
    %1573 = vmatprep.mubr.bf16.mxu0 0
    %1574 = vmatmul.mubr.bf16.gmra.mrb[0].mxu0 %v1499
    %v1575 = vpop.f32.mrb[0].mxu0
    %v1576 = vadd.f32 0.0, %v1575
    %v1577 = vpop.f32.mrb[0].mxu0
    %v1578 = vadd.f32 0.0, %v1577
    %v1579 = vpop.f32.mrb[0].mxu0
    %v1580 = vpop.f32.mrb[0].mxu0
    %1581 = vdwg.mxu0
    %v1582 = vadd.f32 %v1495, %v1535
    %v1583 = vadd.f32 %v1496, %v1537
    %v1584 = vadd.f32 %v1497, %v1576
    %v1585 = vadd.f32 %v1498, %v1578
    %v1586 = vxor.u32 %v1582, 2147483648
    %v1587 = vxor.u32 %v1583, 2147483648
    %v1588 = vmul.f32 %v1586, 1.442695
    %v1589 = vpow.pop %v1588
    %v1590 = vmul.f32 %v1587, 1.442695
    %v1591 = vpow.pop %v1590
    %v1592 = vadd.f32 %v1589, 1.0
    %v1593 = vadd.f32 %v1591, 1.0
    %v1594 = vrcp.pop %v1592
    %v1595 = vmul.f32 1.0, %v1594
    %v1596 = vrcp.pop %v1593
    %v1597 = vmul.f32 1.0, %v1596
    %v1598 = vtanh.pop %v1584
    %v1599 = vxor.u32 %v1585, 2147483648
    %v1600 = vmul.f32 %v1599, 1.442695
    %v1601 = vpow.pop %v1600
    %v1602 = vadd.f32 %v1601, 1.0
    %v1603 = vrcp.pop %v1602
    %v1604 = vmul.f32 1.0, %v1603
    %v1605 = vmul.f32 %v1597, %v1485
    %v1606 = vmul.f32 %v1595, %v1598
    %v1607 = vadd.f32 %v1605, %v1606
    %v1608 = vtanh.pop %v1607
    %v1609 = vmul.f32 %v1604, %v1608
    %s1610 = scalar_lea.vmem [#allocation3], 56
    %1611 = vst [vmem:[%s1610] sm:$0xff] %v1609
    %v1612 = vld [vmem:[#allocation3] sm:$0xff]
    %v1613 = vld [vmem:[#allocation3 + $0x8] sm:$0xff]
    %v1614 = vld [vmem:[#allocation3 + $0x10] sm:$0xff]
    %v1615 = vld [vmem:[#allocation3 + $0x18] sm:$0xff]
    %v1616 = vld [vmem:[#allocation3 + $0x20] sm:$0xff]
    %v1617 = vld [vmem:[#allocation3 + $0x28] sm:$0xff]
    %v1618 = vld [vmem:[#allocation3 + $0x30] sm:$0xff]
    %v1619 = vld [vmem:[#allocation3 + $0x38] sm:$0xff]
    %v1620 = vpack.c.bf16 %v1613, %v1612
    %v1621 = vpack.c.bf16 %v1615, %v1614
    %v1622 = vpack.c.bf16 %v1617, %v1616
    %v1623 = vpack.c.bf16 %v1619, %v1618
    %v1624 = vld [vmem:[#allocation9] sm:$0xf]
    %v1625 = vld [vmem:[#allocation9 + $0x4] sm:$0xf]
    %v1626 = vld [vmem:[#allocation9 + $0x8] sm:$0xf]
    %v1627 = vld [vmem:[#allocation9 + $0xc] sm:$0xf]
    %v1628 = vld [vmem:[#allocation9 + $0x10] sm:$0xf]
    %v1629 = vld [vmem:[#allocation9 + $0x14] sm:$0xf]
    %v1630 = vld [vmem:[#allocation9 + $0x18] sm:$0xf]
    %v1631 = vld [vmem:[#allocation9 + $0x1c] sm:$0xf]
    %v1632 = vld [vmem:[#allocation9 + $0x20] sm:$0xf]
    %v1633 = vld [vmem:[#allocation9 + $0x24] sm:$0xf]
    %v1634 = vld [vmem:[#allocation9 + $0x28] sm:$0xf]
    %v1635 = vld [vmem:[#allocation9 + $0x2c] sm:$0xf]
    %v1636 = vld [vmem:[#allocation9 + $0x30] sm:$0xf]
    %v1637 = vld [vmem:[#allocation9 + $0x34] sm:$0xf]
    %v1638 = vld [vmem:[#allocation9 + $0x38] sm:$0xf]
    %v1639 = vld [vmem:[#allocation9 + $0x3c] sm:$0xf]
    %v1640 = vld [vmem:[%s7] sm:$0x1]
    %v1642 = vlaneseq
    %v1643 = vshrl.u32 %v1642, 7
    %v1644 = vsub.s32 0, %v1643
    %v1645 = vrot.slane %v1640, %v1644
    %v1663 = vunpack.c.l.b16 %v1624
    %v1664 = vunpack.c.l.b16 %v1625
    %v1665 = vunpack.c.l.b16 %v1626
    %v1666 = vunpack.c.l.b16 %v1627
    %v1667 = vunpack.c.l.b16 %v1628
    %v1668 = vunpack.c.l.b16 %v1629
    %v1669 = vunpack.c.l.b16 %v1630
    %v1670 = vunpack.c.l.b16 %v1631
    %v1671 = vunpack.c.l.b16 %v1632
    %v1672 = vunpack.c.l.b16 %v1633
    %v1673 = vunpack.c.l.b16 %v1634
    %v1674 = vunpack.c.l.b16 %v1635
    %v1675 = vunpack.c.l.b16 %v1636
    %v1676 = vunpack.c.l.b16 %v1637
    %v1677 = vunpack.c.l.b16 %v1638
    %v1678 = vunpack.c.l.b16 %v1639
    %v1679 = vpack.c.b16 %v1664, %v1663
    %v1680 = vpack.c.b16 %v1666, %v1665
    %v1681 = vpack.c.b16 %v1668, %v1667
    %v1682 = vpack.c.b16 %v1670, %v1669
    %v1683 = vpack.c.b16 %v1672, %v1671
    %v1684 = vpack.c.b16 %v1674, %v1673
    %v1685 = vpack.c.b16 %v1676, %v1675
    %v1686 = vpack.c.b16 %v1678, %v1677
    %1695 = vmatprep.subr.bf16.mxu0 0
    %1696 = vmatpush1.bf16.msra.mxu0 %v1679
    %1697 = vmatprep.subr.bf16.mxu0 0
    %1698 = vmatpush1.bf16.msra.mxu0 %v1680
    %1699 = vmatprep.subr.bf16.mxu0 0
    %1700 = vmatpush1.bf16.msra.mxu0 %v1681
    %1701 = vmatprep.subr.bf16.mxu0 0
    %1702 = vmatpush1.bf16.msra.mxu0 %v1682
    %1703 = vmatprep.subr.bf16.mxu0 0
    %1704 = vmatpush1.bf16.msra.mxu0 %v1683
    %1705 = vmatprep.subr.bf16.mxu0 0
    %1706 = vmatpush1.bf16.msra.mxu0 %v1684
    %1707 = vmatprep.subr.bf16.mxu0 0
    %1708 = vmatpush1.bf16.msra.mxu0 %v1685
    %1709 = vmatprep.subr.bf16.mxu0 0
    %1710 = vmatpush1.bf16.msra.mxu0 %v1686
    %1711 = vmatprep.subr.bf16.mxu0 0
    %1712 = vmatpush1.bf16.msra.mxu0 0
    %1713 = vmatprep.subr.bf16.mxu0 0
    %1714 = vmatpush1.bf16.msra.mxu0 0
    %1715 = vmatprep.subr.bf16.mxu0 0
    %1716 = vmatpush1.bf16.msra.mxu0 0
    %1717 = vmatprep.subr.bf16.mxu0 0
    %1718 = vmatpush1.bf16.msra.mxu0 0
    %1719 = vmatprep.subr.bf16.mxu0 0
    %1720 = vmatpush1.bf16.msra.mxu0 0
    %1721 = vmatprep.subr.bf16.mxu0 0
    %1722 = vmatpush1.bf16.msra.mxu0 0
    %1723 = vmatprep.subr.bf16.mxu0 0
    %1724 = vmatpush1.bf16.msra.mxu0 0
    %1725 = vmatprep.subr.bf16.mxu0 0
    %1726 = vmatpush1.bf16.msra.mxu0 0
    %1727 = vmatprep.mubr.bf16.mxu0 0
    %1728 = vmatmul.mubr.bf16.gmra.mrb[0].mxu0 %v1620
    %v1729 = vpop.f32.mrb[0].mxu0
    %v1730 = vadd.f32 %v1645, %v1729
    %v1731 = vpop.f32.mrb[0].mxu0
    %v1732 = vpop.f32.mrb[0].mxu0
    %v1733 = vadd.f32 %v1645, %v1732
    %v1734 = vpop.f32.mrb[0].mxu0
    %1735 = vmatprep.mubr.bf16.mxu0 0
    %1736 = vmatmul.mubr.bf16.gmra.mrb[0].mxu0 %v1621
    %v1737 = vpop.f32.mrb[0].mxu0
    %v1738 = vadd.f32 %v1645, %v1737
    %v1739 = vpop.f32.mrb[0].mxu0
    %v1740 = vpop.f32.mrb[0].mxu0
    %v1741 = vadd.f32 %v1645, %v1740
    %v1742 = vpop.f32.mrb[0].mxu0
    %1743 = vmatprep.mubr.bf16.mxu0 0
    %1744 = vmatmul.mubr.bf16.gmra.mrb[0].mxu0 %v1622
    %v1745 = vpop.f32.mrb[0].mxu0
    %v1746 = vadd.f32 %v1645, %v1745
    %v1747 = vpop.f32.mrb[0].mxu0
    %v1748 = vpop.f32.mrb[0].mxu0
    %v1749 = vadd.f32 %v1645, %v1748
    %v1750 = vpop.f32.mrb[0].mxu0
    %1751 = vmatprep.mubr.bf16.mxu0 0
    %1752 = vmatmul.mubr.bf16.gmra.mrb[0].mxu0 %v1623
    %v1753 = vpop.f32.mrb[0].mxu0
    %v1754 = vadd.f32 %v1645, %v1753
    %v1755 = vpop.f32.mrb[0].mxu0
    %v1756 = vpop.f32.mrb[0].mxu0
    %v1757 = vadd.f32 %v1645, %v1756
    %v1758 = vpop.f32.mrb[0].mxu0
    %1759 = vdwg.mxu0
    %1760 = vst [vmem:[#allocation10] sm:$0xff] %v1730
    %1761 = vst [vmem:[#allocation10 + $0x8] sm:$0xff] %v1733
    %1762 = vst [vmem:[#allocation10 + $0x10] sm:$0xff] %v1738
    %1763 = vst [vmem:[#allocation10 + $0x18] sm:$0xff] %v1741
    %1764 = vst [vmem:[#allocation10 + $0x20] sm:$0xff] %v1746
    %1765 = vst [vmem:[#allocation10 + $0x28] sm:$0xff] %v1749
    %1766 = vst [vmem:[#allocation10 + $0x30] sm:$0xff] %v1754
    %1767 = vst [vmem:[#allocation10 + $0x38] sm:$0xff] %v1757
    // Predicated region
    $region46: #{tpu_custom_call.1} parent=1 // pred_check
      _
    $region47: #{tpu_custom_call.1} parent=1 // pred_check_branch
      %1769 = sbr.rel (0) target = $region49
    $region48: #{tpu_custom_call.1} parent=1 // pred_region
      %s1771 = ssub.s32 1024, 1024
      %1772 = vsyncadd [#allocation6], %s1771
      %s1773 = sshll.u32 [#allocation10], 4
      %s1774 = int_to_ptr.vmem [resolvable:$true] %s1773
      %1779 = dma.vmem_to_hbm [thread:$0]  %s1774, 1024, %s8, [#allocation6], 128, 128, 8
    $region49: #{tpu_custom_call.1} parent=1 // pred_fallthru
      _
    // Predicated region
    $region50: #{tpu_custom_call.1} parent=1 // pred_check
      _
    $region51: #{tpu_custom_call.1} parent=1 // pred_check_branch
      %1781 = sbr.rel (0) target = $region53
    $region52: #{tpu_custom_call.1} parent=1 // pred_region
      %1782 = dma.done [#allocation6], 1024
    $region53: #{tpu_custom_call.1} parent=1 // pred_fallthru
      _
    %1783 = vsyncpa [#allocation5], 1
    %1784 = vsyncpa [#allocation8], 1
    %1785 = vsyncpa [#allocation6], 1

</llo_original>
